<compile_context>
chip_gen: v6e
topology: v6e:2x2x1
jax: 0.10.0
libtpu: 0.0.40
codegen_flags: <defaults>
</compile_context>

<pallas_src>
import functools

import jax
import jax.numpy as jnp
from jax.experimental import pallas as pl
from jax.experimental.pallas import tpu as pltpu


def _round_up(a, m):
    return (a + m - 1) // m * m


def _divisors_desc(n):
    small = [d for d in range(1, int(n ** 0.5) + 1) if n % d == 0]
    return sorted({d for x in small for d in (x, n // x)}, reverse=True)


def _vmem_limit_bytes():
    """Per-generation scoped-VMEM limit: v4/v5e/v6e have 128 MiB physical VMEM,
    v7x has 64 MiB per TensorCore; unknown chips keep the default scoped limit."""
    kind = ""
    try:
        kind = jax.devices()[0].device_kind.lower()
    except Exception:
        pass
    if "v7" in kind or "7x" in kind:
        return 48 * 1024 * 1024
    if "v4" in kind or "v5" in kind or "v6" in kind:
        return 100 * 1024 * 1024
    return 32 * 1024 * 1024


def _choose_tb(B, N, D, E, Wp, in_itemsize, out_itemsize, w_bytes,
               vmem_limit, row_align, min_steps=5):
    """Largest batch tile that (a) divides B exactly (no HBM padding of the big
    neighbor/edge arrays), (b) is a multiple of `row_align` (bf16 sublane
    packing), (c) fits a conservative double-buffered VMEM footprint, and
    (d) when possible leaves >= min_steps grid steps (>= 2 per TensorCore on
    v7x so BlockSpec double-buffering has DMA to overlap)."""
    per_row = (2 * in_itemsize * (D + N * (D + E))   # x/nb/eg blocks, double buffered
               + 2 * out_itemsize * Wp               # output block, double buffered
               + 3 * 4 * N * (D + E)                 # f32 elementwise temporaries
               + 4 * (2 * D + E + Wp))               # lhs concat + f32 matmul result
    budget = max(0, vmem_limit // 2 - w_bytes)       # 2x headroom for compiler scratch
    cap = max(1, budget // per_row)
    divs = _divisors_desc(B)
    for ok in (lambda t: t % row_align == 0 and t <= cap and B // t >= min_steps,
               lambda t: t % row_align == 0 and t <= cap,
               lambda t: t % 8 == 0 and t <= cap):
        cands = [t for t in divs if ok(t)]
        if cands:
            return cands[0]
    # TODO(synk): no aligned divisor of B fits the VMEM budget; fall back to a
    # single full-array block (layout rules still allow full-dim blocks).
    return B


def attention_agg3_kernel(x_ref, nb_ref, eg_ref, w_att_ref, w_att2n_ref,
                          w_att2e_ref, w_fc_ref, out_ref, *, negative_slope=0.01):
    x = x_ref[...]                          # (tb, D)    activation dtype (bf16/f32)
    nb = nb_ref[...]                        # (tb, N, D) neighbor features
    eg = eg_ref[...]                        # (tb, N, E) edge features
    w_att = w_att_ref[...]                  # (1, D)
    w2n = w_att2n_ref[...]                  # (1, D)     att2[:D]
    w2e = w_att2e_ref[...]                  # (1, E)     att2[D:]

    # Attention scores: width-1 projections on the VPU (broadcast mul) with f32
    # accumulation; neighbor scores stay in the (tb, N, 1) layout of nb/eg so the
    # later broadcast against (tb, N, D) is a cheap lane broadcast.
    x_att = jnp.sum(x * w_att, axis=-1, keepdims=True,
                    dtype=jnp.float32)                                  # (tb, 1)
    neib_att = (jnp.sum(nb * w2n[None], axis=-1, keepdims=True, dtype=jnp.float32)
                + jnp.sum(eg * w2e[None], axis=-1, keepdims=True,
                          dtype=jnp.float32))                           # (tb, N, 1)

    ws = x_att[:, :, None] + neib_att                                   # (tb, N, 1)
    ws = jnp.where(ws >= 0.0, ws, negative_slope * ws)                  # F.leaky_relu

    # softmax over the neighbor axis (dim=1), numerically stable, EUP reciprocal.
    m = jnp.max(ws, axis=1, keepdims=True)
    e = jnp.exp(ws - m)
    denom = jnp.sum(e, axis=1, keepdims=True)
    ws = e * pl.reciprocal(denom, approx=True)                          # (tb, N, 1)
    # TODO(synk): attn_dropout (p=0) and dropout (p=0.5) are identity at inference.

    # Weighted neighbor aggregation (the bmm), split over the node / edge halves
    # so the (D+E) concat never exists in HBM; f32 accumulation over N.
    ws_c = ws.astype(nb.dtype)
    agg_n = jnp.sum(nb * ws_c, axis=1, dtype=jnp.float32)               # (tb, D)
    agg_e = jnp.sum(eg * ws_c, axis=1, dtype=jnp.float32)               # (tb, E)

    # Single packed fc matmul: w_fc is block-structured so cols [0,O) hold
    # fc_x(x) and cols [O,2O) hold fc_neib(agg) -> one MXU call, one dense store.
    lhs = jnp.concatenate(
        [x, agg_n.astype(w_fc_ref.dtype), agg_e.astype(w_fc_ref.dtype)], axis=1)
    out = jnp.dot(lhs, w_fc_ref[...], preferred_element_type=jnp.float32)  # (tb, Wp)

    # concat_node=True is encoded in the column layout; activation = ReLU.
    # TODO(synk): `activation` is a user-supplied callable in the module; ReLU assumed.
    out_ref[...] = jnp.maximum(out, 0.0).astype(out_ref.dtype)


def attention_aggregator3(x, neibs_flat, edge_emb_flat, mask, w_att, w_att2,
                          w_fcx, w_fcn, *, tb=None, negative_slope=0.01,
                          out_dtype=None):
    """x: (B, D); neibs_flat: (B*N, D); edge_emb_flat: (B*N, E); mask: (B, N)
    (accepted but unused — matches the PyTorch forward). Weights are stored
    transposed w.r.t. nn.Linear: w_att (D,1), w_att2 (D+E,1), w_fcx (D,O),
    w_fcn (D+E,O).  Returns (B, 2*O)."""
    del mask  # the reference forward() never uses it
    B, D = x.shape
    N = neibs_flat.shape[0] // B
    E = edge_emb_flat.shape[1]
    O = w_fcx.shape[1]
    assert w_att.shape == (D, 1) and w_att2.shape == (D + E, 1)
    assert w_fcn.shape == (D + E, O)
    assert neibs_flat.shape == (B * N, D) and edge_emb_flat.shape == (B * N, E)

    in_dtype = x.dtype
    if out_dtype is None:
        out_dtype = in_dtype
    Wp = _round_up(2 * O, 128)     # lane-dense output slab: [fc_x | fc_neib | pad]

    # att / att2 weights as broadcast rows in the activation dtype (bf16 VALU on
    # v6e/v7x); att2 is split into node / edge halves (no (D+E) concat in HBM).
    w_att_row = w_att.reshape(1, D).astype(in_dtype)
    w_att2_n = w_att2[:D].reshape(1, D).astype(in_dtype)
    w_att2_e = w_att2[D:].reshape(1, E).astype(in_dtype)

    # Block-structured packed fc weight: cols [0,O) <- fc_x, cols [O,2O) <- fc_neib.
    w_big = jnp.zeros((2 * D + E, Wp), jnp.float32)
    w_big = w_big.at[:D, :O].set(w_fcx.astype(jnp.float32))
    w_big = w_big.at[D:2 * D, O:2 * O].set(w_fcn[:D].astype(jnp.float32))
    w_big = w_big.at[2 * D:, O:2 * O].set(w_fcn[D:].astype(jnp.float32))
    w_big = w_big.astype(in_dtype)   # bf16 operands -> native MXU path

    nb = neibs_flat.reshape(B, N, D)
    eg = edge_emb_flat.reshape(B, N, E)

    vmem_limit = _vmem_limit_bytes()
    in_itemsize = jnp.dtype(in_dtype).itemsize
    row_align = 16 if in_itemsize < 4 else 8
    if tb is None:
        w_bytes = 2 * (w_big.size * jnp.dtype(in_dtype).itemsize
                       + 2 * (2 * D + E) * in_itemsize)
        tb = _choose_tb(B, N, D, E, Wp, in_itemsize,
                        jnp.dtype(out_dtype).itemsize, w_bytes,
                        vmem_limit, row_align)
    assert B % tb == 0, "tb must divide B (no batch padding of neibs/edge_emb)"

    grid = (B // tb,)
    kernel = functools.partial(attention_agg3_kernel,
                               negative_slope=negative_slope)
    out_p = pl.pallas_call(
        kernel,
        out_shape=jax.ShapeDtypeStruct((B, Wp), out_dtype),
        grid=grid,
        in_specs=[
            pl.BlockSpec((tb, D), lambda i: (i, 0)),          # x
            pl.BlockSpec((tb, N, D), lambda i: (i, 0, 0)),    # neighbor features
            pl.BlockSpec((tb, N, E), lambda i: (i, 0, 0)),    # edge features
            pl.BlockSpec((1, D), lambda i: (0, 0)),           # att weight row
            pl.BlockSpec((1, D), lambda i: (0, 0)),           # att2 (node half)
            pl.BlockSpec((1, E), lambda i: (0, 0)),           # att2 (edge half)
            pl.BlockSpec((2 * D + E, Wp), lambda i: (0, 0)),  # packed fc weight
        ],
        out_specs=pl.BlockSpec((tb, Wp), lambda i: (i, 0)),
        compiler_params=pltpu.CompilerParams(
            dimension_semantics=("parallel",),    # shard batch across TCs on v7x
            vmem_limit_bytes=vmem_limit,
        ),
    )(x, nb, eg, w_att_row, w_att2_n, w_att2_e, w_big)

    # Single contiguous slice drops the lane padding; [fc_x | fc_neib] is
    # already packed in columns [0, 2*O).
    return out_p[:, : 2 * O]


def reference(x, neibs_flat, edge_emb_flat, w_att, w_att2, w_fcx, w_fcn,
              negative_slope=0.01):
    HI = jax.lax.Precision.HIGHEST
    B, D = x.shape
    N = neibs_flat.shape[0] // B
    xf = x.astype(jnp.float32)
    nc = jnp.concatenate([neibs_flat, edge_emb_flat], axis=1).astype(jnp.float32)
    neib_att = jnp.dot(nc, w_att2, precision=HI).reshape(B, N)
    x_att = jnp.dot(xf, w_att, precision=HI).reshape(B, 1)
    ws = jax.nn.softmax(jax.nn.leaky_relu(x_att + neib_att, negative_slope), axis=1)
    agg = jnp.einsum('bn,bnd->bd', ws, nc.reshape(B, N, -1), precision=HI)
    out = jnp.concatenate([jnp.dot(xf, w_fcx, precision=HI),
                           jnp.dot(agg, w_fcn, precision=HI)], axis=1)
    return jnp.maximum(out, 0.0)


if __name__ == "__main__":
    # batch, neighbors-per-node, input_dim, edge_dim, output_dim
    B, N, D, E, O = 256, 8, 64, 32, 48

    key = jax.random.PRNGKey(0)
    kx, kn, ke, km, ka, ka2, kfx, kfn = jax.random.split(key, 8)

    # Activations as bf16 (halves HBM traffic on this mem-bound kernel);
    # softmax / reductions accumulate in f32 inside the kernel.
    x = jax.random.normal(kx, (B, D), dtype=jnp.float32).astype(jnp.bfloat16)
    neibs = jax.random.normal(kn, (B * N, D), dtype=jnp.float32).astype(jnp.bfloat16)
    edge_emb = jax.random.normal(ke, (B * N, E), dtype=jnp.float32).astype(jnp.bfloat16)
    mask = (jax.random.uniform(km, (B, N)) < 0.25).astype(jnp.float32)  # unused by forward

    # Parameters (nn.Linear weights stored transposed so the kernel does x @ W).
    w_att = jax.random.normal(ka, (D, 1), dtype=jnp.float32) * 0.1
    w_att2 = jax.random.normal(ka2, (D + E, 1), dtype=jnp.float32) * 0.1
    w_fcx = jax.random.normal(kfx, (D, O), dtype=jnp.float32) * 0.1
    w_fcn = jax.random.normal(kfn, (D + E, O), dtype=jnp.float32) * 0.1

    out = attention_aggregator3(x, neibs, edge_emb, mask,
                                w_att, w_att2, w_fcx, w_fcn)
    out = jax.block_until_ready(out)

    ref = reference(x, neibs, edge_emb, w_att, w_att2, w_fcx, w_fcn)
    assert out.shape == (B, 2 * O)
    out_f = out.astype(jnp.float32)
    max_err = float(jnp.max(jnp.abs(out_f - ref)))
    assert jnp.allclose(out_f, ref, atol=2e-2, rtol=2e-2), (
        f"mismatch vs JAX reference (max abs err {max_err})")

    print("KERNEL_OK")
</pallas_src>

<mosaic_0001>
module attributes {stable_mosaic.version = 11 : i64} {
  func.func @attention_agg3_kernel(%arg0: i32, %arg1: memref<32x64xbf16, #tpu.memory_space<vmem>>, %arg2: memref<32x8x64xbf16, #tpu.memory_space<vmem>>, %arg3: memref<32x8x32xbf16, #tpu.memory_space<vmem>>, %arg4: memref<1x64xbf16, #tpu.memory_space<vmem>>, %arg5: memref<1x64xbf16, #tpu.memory_space<vmem>>, %arg6: memref<1x32xbf16, #tpu.memory_space<vmem>>, %arg7: memref<160x128xbf16, #tpu.memory_space<vmem>>, %arg8: memref<32x128xbf16, #tpu.memory_space<vmem>>) attributes {dimension_semantics = [#tpu.dimension_semantics<parallel>], iteration_bounds = array<i64: 8>, scalar_prefetch = 0 : i64, scratch_operands = 0 : i64, tpu.core_type = #tpu.core_type<tc>, window_params = [{transform_indices = @transform_0, window_bounds = array<i64: 32, 64>}, {transform_indices = @transform_1, window_bounds = array<i64: 32, 8, 64>}, {transform_indices = @transform_2, window_bounds = array<i64: 32, 8, 32>}, {pipeline_mode = #tpu.pipeline_mode<synchronous>, transform_indices = @transform_3, window_bounds = array<i64: 1, 64>}, {pipeline_mode = #tpu.pipeline_mode<synchronous>, transform_indices = @transform_4, window_bounds = array<i64: 1, 64>}, {pipeline_mode = #tpu.pipeline_mode<synchronous>, transform_indices = @transform_5, window_bounds = array<i64: 1, 32>}, {pipeline_mode = #tpu.pipeline_mode<synchronous>, transform_indices = @transform_6, window_bounds = array<i64: 160, 128>}, {transform_indices = @transform_7, window_bounds = array<i64: 32, 128>}]} {
    %c0 = arith.constant 0 : index
    %c0_0 = arith.constant 0 : index
    %0 = vector.load %arg1[%c0, %c0_0] : memref<32x64xbf16, #tpu.memory_space<vmem>>, vector<32x64xbf16>
    %c0_1 = arith.constant 0 : index
    %c0_2 = arith.constant 0 : index
    %c0_3 = arith.constant 0 : index
    %1 = vector.load %arg2[%c0_1, %c0_2, %c0_3] : memref<32x8x64xbf16, #tpu.memory_space<vmem>>, vector<32x8x64xbf16>
    %c0_4 = arith.constant 0 : index
    %c0_5 = arith.constant 0 : index
    %c0_6 = arith.constant 0 : index
    %2 = vector.load %arg3[%c0_4, %c0_5, %c0_6] : memref<32x8x32xbf16, #tpu.memory_space<vmem>>, vector<32x8x32xbf16>
    %c0_7 = arith.constant 0 : index
    %c0_8 = arith.constant 0 : index
    %3 = vector.load %arg4[%c0_7, %c0_8] : memref<1x64xbf16, #tpu.memory_space<vmem>>, vector<1x64xbf16>
    %c0_9 = arith.constant 0 : index
    %c0_10 = arith.constant 0 : index
    %4 = vector.load %arg5[%c0_9, %c0_10] : memref<1x64xbf16, #tpu.memory_space<vmem>>, vector<1x64xbf16>
    %c0_11 = arith.constant 0 : index
    %c0_12 = arith.constant 0 : index
    %5 = vector.load %arg6[%c0_11, %c0_12] : memref<1x32xbf16, #tpu.memory_space<vmem>>, vector<1x32xbf16>
    %6 = vector.broadcast %3 : vector<1x64xbf16> to vector<32x64xbf16>
    %7 = arith.mulf %0, %6 : vector<32x64xbf16>
    %8 = arith.extf %7 : vector<32x64xbf16> to vector<32x64xf32>
    %cst = arith.constant dense<0.000000e+00> : vector<32xf32>
    %9 = vector.multi_reduction <add>, %8, %cst [1] : vector<32x64xf32> to vector<32xf32>
    %10 = vector.shape_cast %9 : vector<32xf32> to vector<32x1xf32>
    %11 = vector.shape_cast %4 : vector<1x64xbf16> to vector<1x1x64xbf16>
    %12 = vector.broadcast %11 : vector<1x1x64xbf16> to vector<32x8x64xbf16>
    %13 = arith.mulf %1, %12 : vector<32x8x64xbf16>
    %14 = arith.extf %13 : vector<32x8x64xbf16> to vector<32x8x64xf32>
    %cst_13 = arith.constant dense<0.000000e+00> : vector<32x8xf32>
    %15 = vector.multi_reduction <add>, %14, %cst_13 [2] : vector<32x8x64xf32> to vector<32x8xf32>
    %16 = vector.shape_cast %15 : vector<32x8xf32> to vector<32x8x1xf32>
    %17 = vector.shape_cast %5 : vector<1x32xbf16> to vector<1x1x32xbf16>
    %18 = vector.broadcast %17 : vector<1x1x32xbf16> to vector<32x8x32xbf16>
    %19 = arith.mulf %2, %18 : vector<32x8x32xbf16>
    %20 = arith.extf %19 : vector<32x8x32xbf16> to vector<32x8x32xf32>
    %cst_14 = arith.constant dense<0.000000e+00> : vector<32x8xf32>
    %21 = vector.multi_reduction <add>, %20, %cst_14 [2] : vector<32x8x32xf32> to vector<32x8xf32>
    %22 = vector.shape_cast %21 : vector<32x8xf32> to vector<32x8x1xf32>
    %23 = arith.addf %16, %22 : vector<32x8x1xf32>
    %24 = vector.shape_cast %10 : vector<32x1xf32> to vector<32x1x1xf32>
    %25 = vector.broadcast %24 : vector<32x1x1xf32> to vector<32x8x1xf32>
    %26 = arith.addf %25, %23 : vector<32x8x1xf32>
    %cst_15 = arith.constant 0.000000e+00 : f32
    %27 = vector.broadcast %cst_15 : f32 to vector<32x8x1xf32>
    %28 = arith.cmpf oge, %26, %27 : vector<32x8x1xf32>
    %cst_16 = arith.constant 0.00999999977 : f32
    %29 = vector.broadcast %cst_16 : f32 to vector<32x8x1xf32>
    %30 = arith.mulf %29, %26 : vector<32x8x1xf32>
    %31 = arith.select %28, %26, %30 : vector<32x8x1xi1>, vector<32x8x1xf32>
    %cst_17 = arith.constant dense<0xFF800000> : vector<32x1xf32>
    %32 = vector.multi_reduction <maximumf>, %31, %cst_17 [1] : vector<32x8x1xf32> to vector<32x1xf32>
    %33 = vector.shape_cast %32 : vector<32x1xf32> to vector<32x1x1xf32>
    %34 = vector.broadcast %33 : vector<32x1x1xf32> to vector<32x8x1xf32>
    %35 = arith.subf %31, %34 : vector<32x8x1xf32>
    %36 = math.exp %35 : vector<32x8x1xf32>
    %cst_18 = arith.constant dense<0.000000e+00> : vector<32x1xf32>
    %37 = vector.multi_reduction <add>, %36, %cst_18 [1] : vector<32x8x1xf32> to vector<32x1xf32>
    %38 = vector.shape_cast %37 : vector<32x1xf32> to vector<32x1x1xf32>
    %39 = tpu.reciprocal %38 {approx = true} : vector<32x1x1xf32> -> vector<32x1x1xf32>
    %40 = vector.broadcast %39 : vector<32x1x1xf32> to vector<32x8x1xf32>
    %41 = arith.mulf %36, %40 : vector<32x8x1xf32>
    %42 = arith.truncf %41 : vector<32x8x1xf32> to vector<32x8x1xbf16>
    %43 = vector.broadcast %42 : vector<32x8x1xbf16> to vector<32x8x64xbf16>
    %44 = arith.mulf %1, %43 : vector<32x8x64xbf16>
    %45 = arith.extf %44 : vector<32x8x64xbf16> to vector<32x8x64xf32>
    %cst_19 = arith.constant dense<0.000000e+00> : vector<32x64xf32>
    %46 = vector.multi_reduction <add>, %45, %cst_19 [1] : vector<32x8x64xf32> to vector<32x64xf32>
    %47 = vector.broadcast %42 : vector<32x8x1xbf16> to vector<32x8x32xbf16>
    %48 = arith.mulf %2, %47 : vector<32x8x32xbf16>
    %49 = arith.extf %48 : vector<32x8x32xbf16> to vector<32x8x32xf32>
    %cst_20 = arith.constant dense<0.000000e+00> : vector<32x32xf32>
    %50 = vector.multi_reduction <add>, %49, %cst_20 [1] : vector<32x8x32xf32> to vector<32x32xf32>
    %51 = arith.truncf %46 : vector<32x64xf32> to vector<32x64xbf16>
    %52 = arith.truncf %50 : vector<32x32xf32> to vector<32x32xbf16>
    %53 = tpu.concatenate %0, %51, %52 in 1 : vector<32x64xbf16>, vector<32x64xbf16>, vector<32x32xbf16> -> vector<32x160xbf16>
    %c0_21 = arith.constant 0 : index
    %c0_22 = arith.constant 0 : index
    %54 = vector.load %arg7[%c0_21, %c0_22] : memref<160x128xbf16, #tpu.memory_space<vmem>>, vector<160x128xbf16>
    %cst_23 = arith.constant dense<0.000000e+00> : vector<32x128xf32>
    %55 = tpu.matmul %53, %54, %cst_23 {dimension_numbers = #tpu.dot_dimension_numbers<[1], [0], [0], [1], [0, 0, 1, 1], [], []>} : vector<32x160xbf16>, vector<160x128xbf16>, vector<32x128xf32> -> vector<32x128xf32>
    %cst_24 = arith.constant 0.000000e+00 : f32
    %56 = vector.broadcast %cst_24 : f32 to vector<32x128xf32>
    %57 = arith.maximumf %55, %56 : vector<32x128xf32>
    %58 = arith.truncf %57 : vector<32x128xf32> to vector<32x128xbf16>
    %c0_25 = arith.constant 0 : index
    %c0_26 = arith.constant 0 : index
    %59 = vector.load %arg8[%c0_25, %c0_26] : memref<32x128xbf16, #tpu.memory_space<vmem>>, vector<32x128xbf16>
    tpu.vector_store %arg8[%c0_25, %c0_26], %58 {strides = array<i32>} : memref<32x128xbf16, #tpu.memory_space<vmem>>, vector<32x128xbf16>,
    return
  }
  func.func @transform_0(%arg0: i32) -> (i32, i32) {
    %c0_i32 = arith.constant 0 : i32
    %c0_i32_0 = arith.constant 0 : i32
    return %arg0, %c0_i32 : i32, i32
  }
  func.func @transform_1(%arg0: i32) -> (i32, i32, i32) {
    %c0_i32 = arith.constant 0 : i32
    %c0_i32_0 = arith.constant 0 : i32
    %c0_i32_1 = arith.constant 0 : i32
    return %arg0, %c0_i32, %c0_i32_0 : i32, i32, i32
  }
  func.func @transform_2(%arg0: i32) -> (i32, i32, i32) {
    %c0_i32 = arith.constant 0 : i32
    %c0_i32_0 = arith.constant 0 : i32
    %c0_i32_1 = arith.constant 0 : i32
    return %arg0, %c0_i32, %c0_i32_0 : i32, i32, i32
  }
  func.func @transform_3(%arg0: i32) -> (i32, i32) {
    %c0_i32 = arith.constant 0 : i32
    %c0_i32_0 = arith.constant 0 : i32
    %c0_i32_1 = arith.constant 0 : i32
    return %c0_i32, %c0_i32_0 : i32, i32
  }
  func.func @transform_4(%arg0: i32) -> (i32, i32) {
    %c0_i32 = arith.constant 0 : i32
    %c0_i32_0 = arith.constant 0 : i32
    %c0_i32_1 = arith.constant 0 : i32
    return %c0_i32, %c0_i32_0 : i32, i32
  }
  func.func @transform_5(%arg0: i32) -> (i32, i32) {
    %c0_i32 = arith.constant 0 : i32
    %c0_i32_0 = arith.constant 0 : i32
    %c0_i32_1 = arith.constant 0 : i32
    return %c0_i32, %c0_i32_0 : i32, i32
  }
  func.func @transform_6(%arg0: i32) -> (i32, i32) {
    %c0_i32 = arith.constant 0 : i32
    %c0_i32_0 = arith.constant 0 : i32
    %c0_i32_1 = arith.constant 0 : i32
    return %c0_i32, %c0_i32_0 : i32, i32
  }
  func.func @transform_7(%arg0: i32) -> (i32, i32) {
    %c0_i32 = arith.constant 0 : i32
    %c0_i32_0 = arith.constant 0 : i32
    return %arg0, %c0_i32 : i32, i32
  }
}

</mosaic_0001>

<llo_original>
// kernel: tpu_custom_call.1
$region0: #{tpu_custom_call.1}
  #allocation0 [shape = 'u32[]', space=smem, size = 0x4, offset = 0x4, fixed_abs, tag = 'smem constant byte address 0x4 - core index']
  #allocation1 [shape = 'u32[144,128]{1,0:T(1,128)}', space=vmem, size = 0x12000, scoped, tag = 'internal scratch']
  %s0 = inlined_call_operand.vmem [shape: bf16[256,64], index: 0, kind: input, shape index: {}]
  %s1 = inlined_call_operand.vmem [shape: bf16[256,8,64], index: 1, kind: input, shape index: {}]
  %s2 = inlined_call_operand.vmem [shape: bf16[256,8,32], index: 2, kind: input, shape index: {}]
  %s3 = inlined_call_operand.vmem [shape: bf16[1,64], index: 3, kind: input, shape index: {}]
  %s4 = inlined_call_operand.vmem [shape: bf16[1,64], index: 4, kind: input, shape index: {}]
  %s5 = inlined_call_operand.vmem [shape: bf16[1,32], index: 5, kind: input, shape index: {}]
  %s6 = inlined_call_operand.vmem [shape: bf16[160,128], index: 6, kind: input, shape index: {}]
  %s7 = inlined_call_operand.hbm [shape: bf16[256,128], index: 7, kind: output, shape index: {}]
  %s8 = sld [smem:[#allocation0]]
  $region61: #{tpu_custom_call.1} parent=0
    _
  %s10 = ssub.s32 1, %s8
  %s11 = scalar_select 0, %s10, %s8
  $region1: #{tpu_custom_call.1} parent=0
    #allocation2 [shape = 'u8[16384]{0}', space=vmem, size = 0x4000, scoped, tag = 'output window, operand 0']
    #allocation3 [shape = 's32[2]{0}', space=sflag, size = 0x8, scoped, tag = 'scoped memory for tpu_custom_call.1']
    %12 = vsyncpa [#allocation3], 0
    %s13 = scalar_lea.sflag [#allocation3], 1
    %14 = vsyncpa %s13, 0
    loop: start=0, step=1, limit=10
    $region2: #{tpu_custom_call.1} parent=1 // loop_pre_header
      _
    $region3: #{tpu_custom_call.1} parent=1 // loop_header
      %s16 = sphi 0, %s20
      %p17 = scmp.ge.s32.totalorder %s16, 10
      %s26 = sphi 0, %s28
      %s29 = sphi 0, %s26
      %s30 = sphi 0, %s29
      %s46 = sphi 0, %s30
      %s52 = sphi 0, %s54
      %s55 = sphi 0, %s52
      %s56 = sphi 0, %s55
      %s72 = sphi 0, %s56
      %s78 = sphi 0, %s80
      %s81 = sphi 0, %s78
      %s82 = sphi 0, %s81
      %s98 = sphi 0, %s82
      %s102 = sphi 0, %s102
      %s104 = sphi 0, %s102
      %s105 = sphi 0, %s104
      %s119 = sphi 0, %s105
      %s123 = sphi 0, %s123
      %s125 = sphi 0, %s123
      %s126 = sphi 0, %s125
      %s140 = sphi 0, %s126
      %s144 = sphi 0, %s144
      %s146 = sphi 0, %s144
      %s147 = sphi 0, %s146
      %s161 = sphi 0, %s147
      %s165 = sphi 0, %s165
      %s167 = sphi 0, %s165
      %s168 = sphi 0, %s167
      %s182 = sphi 0, %s168
      %s188 = sphi 0, %s190
      %s191 = sphi 0, %s188
      %s192 = sphi 0, %s191
      %s208 = sphi 0, %s192
    $region4: #{tpu_custom_call.1} parent=1 // loop_header_branch
      %19 = sbr.rel (%p17) target = $region8
    $region5: #{tpu_custom_call.1} parent=1 // loop_body
      %s21 = ssub.s32 %s16, 1
      %s22 = ssub.s32 %s16, 2
      %s23 = sadd.s32 %s16, 1
      %s24 = ssub.s32 %s16, %s23
      %p25 = scmp.eq.s32.totalorder %s24, 0
      %s27 = sadd.s32 %s26, 1
      %s28 = scalar_select %p25, %s26, %s27
      %p31 = pneg %p25
      %p32 = scmp.eq.s32.totalorder %s16, 7
      %p33 = por %p31, %p32
      %p34 = scmp.ne.s32.totalorder %s26, %s29
      %p35 = scmp.eq.s32.totalorder %s16, 0
      %p36 = por %p34, %p35
      %p37 = scmp.ne.s32.totalorder %s26, %s29
      %p38 = scmp.eq.s32.totalorder %s21, 7
      %p39 = por %p37, %p38
      %p40 = scmp.ne.s32.totalorder %s29, %s30
      %p41 = scmp.eq.s32.totalorder %s21, 0
      %p42 = por %p40, %p41
      %p43 = scmp.ne.s32.totalorder %s29, %s30
      %p44 = scmp.eq.s32.totalorder %s22, 7
      %p45 = por %p43, %p44
      %p47 = scmp.ne.s32.totalorder %s30, %s46
      %p48 = scmp.eq.s32.totalorder %s22, 0
      %p49 = por %p47, %p48
      %s50 = ssub.s32 %s16, %s23
      %p51 = scmp.eq.s32.totalorder %s50, 0
      %s53 = sadd.s32 %s52, 1
      %s54 = scalar_select %p51, %s52, %s53
      %p57 = pneg %p51
      %p58 = scmp.eq.s32.totalorder %s16, 7
      %p59 = por %p57, %p58
      %p60 = scmp.ne.s32.totalorder %s52, %s55
      %p61 = scmp.eq.s32.totalorder %s16, 0
      %p62 = por %p60, %p61
      %p63 = scmp.ne.s32.totalorder %s52, %s55
      %p64 = scmp.eq.s32.totalorder %s21, 7
      %p65 = por %p63, %p64
      %p66 = scmp.ne.s32.totalorder %s55, %s56
      %p67 = scmp.eq.s32.totalorder %s21, 0
      %p68 = por %p66, %p67
      %p69 = scmp.ne.s32.totalorder %s55, %s56
      %p70 = scmp.eq.s32.totalorder %s22, 7
      %p71 = por %p69, %p70
      %p73 = scmp.ne.s32.totalorder %s56, %s72
      %p74 = scmp.eq.s32.totalorder %s22, 0
      %p75 = por %p73, %p74
      %s76 = ssub.s32 %s16, %s23
      %p77 = scmp.eq.s32.totalorder %s76, 0
      %s79 = sadd.s32 %s78, 1
      %s80 = scalar_select %p77, %s78, %s79
      %p83 = pneg %p77
      %p84 = scmp.eq.s32.totalorder %s16, 7
      %p85 = por %p83, %p84
      %p86 = scmp.ne.s32.totalorder %s78, %s81
      %p87 = scmp.eq.s32.totalorder %s16, 0
      %p88 = por %p86, %p87
      %p89 = scmp.ne.s32.totalorder %s78, %s81
      %p90 = scmp.eq.s32.totalorder %s21, 7
      %p91 = por %p89, %p90
      %p92 = scmp.ne.s32.totalorder %s81, %s82
      %p93 = scmp.eq.s32.totalorder %s21, 0
      %p94 = por %p92, %p93
      %p95 = scmp.ne.s32.totalorder %s81, %s82
      %p96 = scmp.eq.s32.totalorder %s22, 7
      %p97 = por %p95, %p96
      %p99 = scmp.ne.s32.totalorder %s82, %s98
      %p100 = scmp.eq.s32.totalorder %s22, 0
      %p101 = por %p99, %p100
      %s103 = sadd.s32 %s102, 1
      %p106 = scmp.eq.s32.totalorder %s16, 7
      %p107 = scmp.ne.s32.totalorder %s102, %s104
      %p108 = scmp.eq.s32.totalorder %s16, 0
      %p109 = por %p107, %p108
      %p110 = scmp.ne.s32.totalorder %s102, %s104
      %p111 = scmp.eq.s32.totalorder %s21, 7
      %p112 = por %p110, %p111
      %p113 = scmp.ne.s32.totalorder %s104, %s105
      %p114 = scmp.eq.s32.totalorder %s21, 0
      %p115 = por %p113, %p114
      %p116 = scmp.ne.s32.totalorder %s104, %s105
      %p117 = scmp.eq.s32.totalorder %s22, 7
      %p118 = por %p116, %p117
      %p120 = scmp.ne.s32.totalorder %s105, %s119
      %p121 = scmp.eq.s32.totalorder %s22, 0
      %p122 = por %p120, %p121
      %s124 = sadd.s32 %s123, 1
      %p127 = scmp.eq.s32.totalorder %s16, 7
      %p128 = scmp.ne.s32.totalorder %s123, %s125
      %p129 = scmp.eq.s32.totalorder %s16, 0
      %p130 = por %p128, %p129
      %p131 = scmp.ne.s32.totalorder %s123, %s125
      %p132 = scmp.eq.s32.totalorder %s21, 7
      %p133 = por %p131, %p132
      %p134 = scmp.ne.s32.totalorder %s125, %s126
      %p135 = scmp.eq.s32.totalorder %s21, 0
      %p136 = por %p134, %p135
      %p137 = scmp.ne.s32.totalorder %s125, %s126
      %p138 = scmp.eq.s32.totalorder %s22, 7
      %p139 = por %p137, %p138
      %p141 = scmp.ne.s32.totalorder %s126, %s140
      %p142 = scmp.eq.s32.totalorder %s22, 0
      %p143 = por %p141, %p142
      %s145 = sadd.s32 %s144, 1
      %p148 = scmp.eq.s32.totalorder %s16, 7
      %p149 = scmp.ne.s32.totalorder %s144, %s146
      %p150 = scmp.eq.s32.totalorder %s16, 0
      %p151 = por %p149, %p150
      %p152 = scmp.ne.s32.totalorder %s144, %s146
      %p153 = scmp.eq.s32.totalorder %s21, 7
      %p154 = por %p152, %p153
      %p155 = scmp.ne.s32.totalorder %s146, %s147
      %p156 = scmp.eq.s32.totalorder %s21, 0
      %p157 = por %p155, %p156
      %p158 = scmp.ne.s32.totalorder %s146, %s147
      %p159 = scmp.eq.s32.totalorder %s22, 7
      %p160 = por %p158, %p159
      %p162 = scmp.ne.s32.totalorder %s147, %s161
      %p163 = scmp.eq.s32.totalorder %s22, 0
      %p164 = por %p162, %p163
      %s166 = sadd.s32 %s165, 1
      %p169 = scmp.eq.s32.totalorder %s16, 7
      %p170 = scmp.ne.s32.totalorder %s165, %s167
      %p171 = scmp.eq.s32.totalorder %s16, 0
      %p172 = por %p170, %p171
      %p173 = scmp.ne.s32.totalorder %s165, %s167
      %p174 = scmp.eq.s32.totalorder %s21, 7
      %p175 = por %p173, %p174
      %p176 = scmp.ne.s32.totalorder %s167, %s168
      %p177 = scmp.eq.s32.totalorder %s21, 0
      %p178 = por %p176, %p177
      %p179 = scmp.ne.s32.totalorder %s167, %s168
      %p180 = scmp.eq.s32.totalorder %s22, 7
      %p181 = por %p179, %p180
      %p183 = scmp.ne.s32.totalorder %s168, %s182
      %p184 = scmp.eq.s32.totalorder %s22, 0
      %p185 = por %p183, %p184
      %s186 = ssub.s32 %s16, %s23
      %p187 = scmp.eq.s32.totalorder %s186, 0
      %s189 = sadd.s32 %s188, 1
      %s190 = scalar_select %p187, %s188, %s189
      %p193 = pneg %p187
      %p194 = scmp.eq.s32.totalorder %s16, 7
      %p195 = por %p193, %p194
      %p196 = scmp.ne.s32.totalorder %s188, %s191
      %p197 = scmp.eq.s32.totalorder %s16, 0
      %p198 = por %p196, %p197
      %p199 = scmp.ne.s32.totalorder %s188, %s191
      %p200 = scmp.eq.s32.totalorder %s21, 7
      %p201 = por %p199, %p200
      %p202 = scmp.ne.s32.totalorder %s191, %s192
      %p203 = scmp.eq.s32.totalorder %s21, 0
      %p204 = por %p202, %p203
      %p205 = scmp.ne.s32.totalorder %s191, %s192
      %p206 = scmp.eq.s32.totalorder %s22, 7
      %p207 = por %p205, %p206
      %p209 = scmp.ne.s32.totalorder %s192, %s208
      %p210 = scmp.eq.s32.totalorder %s22, 0
      %p211 = por %p209, %p210
      %p212 = scmp.le.s32.totalorder 1, %s16
      %p213 = scmp.lt.s32.totalorder %s16, 9
      %p214 = pnand %p212, %p213
      %p215 = pneg %p214
      // Predicated region
      $region9: #{tpu_custom_call.1} parent=5 // pred_check
        _
      $region10: #{tpu_custom_call.1} parent=5 // pred_check_branch
        %217 = sbr.rel (%p214) target = $region12
      $region11: #{tpu_custom_call.1} parent=5 // pred_region
        %s218 = ssub.s32 %s16, 1
        // Predicated region
        $region13: #{tpu_custom_call.1} parent=11 // pred_check
          %p219 = pneg %p115
        $region14: #{tpu_custom_call.1} parent=11 // pred_check_branch
          %221 = sbr.rel (%p219) target = $region16
        $region15: #{tpu_custom_call.1} parent=11 // pred_region
          _
        $region16: #{tpu_custom_call.1} parent=11 // pred_fallthru
          _
        // Predicated region
        $region17: #{tpu_custom_call.1} parent=11 // pred_check
          %p222 = pneg %p136
        $region18: #{tpu_custom_call.1} parent=11 // pred_check_branch
          %224 = sbr.rel (%p222) target = $region20
        $region19: #{tpu_custom_call.1} parent=11 // pred_region
          _
        $region20: #{tpu_custom_call.1} parent=11 // pred_fallthru
          _
        // Predicated region
        $region21: #{tpu_custom_call.1} parent=11 // pred_check
          %p225 = pneg %p157
        $region22: #{tpu_custom_call.1} parent=11 // pred_check_branch
          %227 = sbr.rel (%p225) target = $region24
        $region23: #{tpu_custom_call.1} parent=11 // pred_region
          _
        $region24: #{tpu_custom_call.1} parent=11 // pred_fallthru
          _
        // Predicated region
        $region25: #{tpu_custom_call.1} parent=11 // pred_check
          %p228 = pneg %p178
        $region26: #{tpu_custom_call.1} parent=11 // pred_check_branch
          %230 = sbr.rel (%p228) target = $region28
        $region27: #{tpu_custom_call.1} parent=11 // pred_region
          _
        $region28: #{tpu_custom_call.1} parent=11 // pred_fallthru
          _
      $region12: #{tpu_custom_call.1} parent=5 // pred_fallthru
        _
      %p231 = scmp.lt.s32.totalorder %s16, 8
      // Predicated region
      $region29: #{tpu_custom_call.1} parent=5 // pred_check
        %p232 = pneg %p231
      $region30: #{tpu_custom_call.1} parent=5 // pred_check_branch
        %234 = sbr.rel (%p232) target = $region32
      $region31: #{tpu_custom_call.1} parent=5 // pred_region
        // Predicated region
        $region33: #{tpu_custom_call.1} parent=31 // pred_check
          %p235 = pneg %p36
        $region34: #{tpu_custom_call.1} parent=31 // pred_check_branch
          %237 = sbr.rel (%p235) target = $region36
        $region35: #{tpu_custom_call.1} parent=31 // pred_region
          %s238 = smul.u32 4, %s16
          %p239 = scmp.lt.s32.totalorder %s238, 31
          %s240 = scalar_select %p239, %s238, 31
          %s241 = smul.addr %s240, 4
          %s242 = scalar_lea.vmem %s0, %s241
          %s243 = smul.u32 4, %s16
        $region36: #{tpu_custom_call.1} parent=31 // pred_fallthru
          _
        // Predicated region
        $region37: #{tpu_custom_call.1} parent=31 // pred_check
          %p244 = pneg %p62
        $region38: #{tpu_custom_call.1} parent=31 // pred_check_branch
          %246 = sbr.rel (%p244) target = $region40
        $region39: #{tpu_custom_call.1} parent=31 // pred_region
          %s247 = smul.u32 32, %s16
          %p248 = scmp.lt.s32.totalorder %s247, 255
          %s249 = scalar_select %p248, %s247, 255
          %s250 = smul.addr %s249, 4
          %s251 = scalar_lea.vmem %s1, %s250
          %s252 = smul.u32 32, %s16
        $region40: #{tpu_custom_call.1} parent=31 // pred_fallthru
          _
        // Predicated region
        $region41: #{tpu_custom_call.1} parent=31 // pred_check
          %p253 = pneg %p88
        $region42: #{tpu_custom_call.1} parent=31 // pred_check_branch
          %255 = sbr.rel (%p253) target = $region44
        $region43: #{tpu_custom_call.1} parent=31 // pred_region
          %s256 = smul.u32 32, %s16
          %p257 = scmp.lt.s32.totalorder %s256, 255
          %s258 = scalar_select %p257, %s256, 255
          %s259 = smul.addr %s258, 4
          %s260 = scalar_lea.vmem %s2, %s259
          %s261 = smul.u32 32, %s16
        $region44: #{tpu_custom_call.1} parent=31 // pred_fallthru
          _
      $region32: #{tpu_custom_call.1} parent=5 // pred_fallthru
        _
      %p262 = scmp.le.s32.totalorder 1, %s16
      %p263 = scmp.lt.s32.totalorder %s16, 9
      %p264 = pnand %p262, %p263
      %p265 = pneg %p264
      // Predicated region
      $region45: #{tpu_custom_call.1} parent=5 // pred_check
        _
      $region46: #{tpu_custom_call.1} parent=5 // pred_check_branch
        %267 = sbr.rel (%p264) target = $region48
      $region47: #{tpu_custom_call.1} parent=5 // pred_region
        %s268 = ssub.s32 %s16, 1
        %s269 = smul.u32 4, %s21
        %p270 = scmp.lt.s32.totalorder %s269, 31
        %s271 = scalar_select %p270, %s269, 31
        %s272 = smul.addr %s271, 4
        %s273 = scalar_lea.vmem %s0, %s272
        %p274 = pneg %p42
        %p275 = pneg %p39
        %s276 = smul.u32 32, %s21
        %p277 = scmp.lt.s32.totalorder %s276, 255
        %s278 = scalar_select %p277, %s276, 255
        %s279 = smul.addr %s278, 4
        %s280 = scalar_lea.vmem %s1, %s279
        %p281 = pneg %p68
        %p282 = pneg %p65
        %s283 = smul.u32 32, %s21
        %p284 = scmp.lt.s32.totalorder %s283, 255
        %s285 = scalar_select %p284, %s283, 255
        %s286 = smul.addr %s285, 4
        %s287 = scalar_lea.vmem %s2, %s286
        %p288 = pneg %p94
        %p289 = pneg %p91
        %p290 = pneg %p115
        %p291 = pneg %p112
        %p292 = pneg %p136
        %p293 = pneg %p133
        %p294 = pneg %p157
        %p295 = pneg %p154
        %p296 = pneg %p178
        %p297 = pneg %p175
        %p298 = pneg %p204
        %p299 = pneg %p201
        %s300 = sand.u32 %s191, 1
        %s301 = scalar_lea.sflag [#allocation3], %s300
        %s302 = sand.u32 %s191, 1
        %s303 = smul.addr %s302, 16
        %s304 = scalar_lea.vmem [#allocation2], %s303
        %s305 = smul.u32 4, %s21
        %p306 = scmp.lt.s32.totalorder %s305, 31
        %s307 = scalar_select %p306, %s305, 31
        %s308 = smul.addr %s307, 4
        %s309 = scalar_lea.vmem %s0, %s308
        %s310 = smul.u32 4, %s21
        %s311 = smul.u32 32, %s21
        %p312 = scmp.lt.s32.totalorder %s311, 255
        %s313 = scalar_select %p312, %s311, 255
        %s314 = smul.addr %s313, 4
        %s315 = scalar_lea.vmem %s1, %s314
        %s316 = smul.u32 32, %s21
        %s317 = smul.u32 32, %s21
        %p318 = scmp.lt.s32.totalorder %s317, 255
        %s319 = scalar_select %p318, %s317, 255
        %s320 = smul.addr %s319, 4
        %s321 = scalar_lea.vmem %s2, %s320
        %s322 = smul.u32 32, %s21
        %s323 = smul.u32 4, %s21
        %v325 = vld [vmem:[%s309] sm:$0xf]
        %v326 = vld [vmem:[%s309 + $0x4] sm:$0xf]
        %v327 = vld [vmem:[%s309 + $0x8] sm:$0xf]
        %v328 = vld [vmem:[%s309 + $0xc] sm:$0xf]
        %v329 = vld [vmem:[%s315] sm:$0xf]
        %v330 = vld [vmem:[%s315 + $0x4] sm:$0xf]
        %v331 = vld [vmem:[%s315 + $0x8] sm:$0xf]
        %v332 = vld [vmem:[%s315 + $0xc] sm:$0xf]
        %v333 = vld [vmem:[%s315 + $0x10] sm:$0xf]
        %v334 = vld [vmem:[%s315 + $0x14] sm:$0xf]
        %v335 = vld [vmem:[%s315 + $0x18] sm:$0xf]
        %v336 = vld [vmem:[%s315 + $0x1c] sm:$0xf]
        %v337 = vld [vmem:[%s315 + $0x20] sm:$0xf]
        %v338 = vld [vmem:[%s315 + $0x24] sm:$0xf]
        %v339 = vld [vmem:[%s315 + $0x28] sm:$0xf]
        %v340 = vld [vmem:[%s315 + $0x2c] sm:$0xf]
        %v341 = vld [vmem:[%s315 + $0x30] sm:$0xf]
        %v342 = vld [vmem:[%s315 + $0x34] sm:$0xf]
        %v343 = vld [vmem:[%s315 + $0x38] sm:$0xf]
        %v344 = vld [vmem:[%s315 + $0x3c] sm:$0xf]
        %v345 = vld [vmem:[%s315 + $0x40] sm:$0xf]
        %v346 = vld [vmem:[%s315 + $0x44] sm:$0xf]
        %v347 = vld [vmem:[%s315 + $0x48] sm:$0xf]
        %v348 = vld [vmem:[%s315 + $0x4c] sm:$0xf]
        %v349 = vld [vmem:[%s315 + $0x50] sm:$0xf]
        %v350 = vld [vmem:[%s315 + $0x54] sm:$0xf]
        %v351 = vld [vmem:[%s315 + $0x58] sm:$0xf]
        %v352 = vld [vmem:[%s315 + $0x5c] sm:$0xf]
        %v353 = vld [vmem:[%s315 + $0x60] sm:$0xf]
        %v354 = vld [vmem:[%s315 + $0x64] sm:$0xf]
        %v355 = vld [vmem:[%s315 + $0x68] sm:$0xf]
        %v356 = vld [vmem:[%s315 + $0x6c] sm:$0xf]
        %v357 = vld [vmem:[%s315 + $0x70] sm:$0xf]
        %v358 = vld [vmem:[%s315 + $0x74] sm:$0xf]
        %v359 = vld [vmem:[%s315 + $0x78] sm:$0xf]
        %v360 = vld [vmem:[%s315 + $0x7c] sm:$0xf]
        %v361 = vld [vmem:[%s321] sm:$0xf]
        %v362 = vld [vmem:[%s321 + $0x4] sm:$0xf]
        %v363 = vld [vmem:[%s321 + $0x8] sm:$0xf]
        %v364 = vld [vmem:[%s321 + $0xc] sm:$0xf]
        %v365 = vld [vmem:[%s321 + $0x10] sm:$0xf]
        %v366 = vld [vmem:[%s321 + $0x14] sm:$0xf]
        %v367 = vld [vmem:[%s321 + $0x18] sm:$0xf]
        %v368 = vld [vmem:[%s321 + $0x1c] sm:$0xf]
        %v369 = vld [vmem:[%s321 + $0x20] sm:$0xf]
        %v370 = vld [vmem:[%s321 + $0x24] sm:$0xf]
        %v371 = vld [vmem:[%s321 + $0x28] sm:$0xf]
        %v372 = vld [vmem:[%s321 + $0x2c] sm:$0xf]
        %v373 = vld [vmem:[%s321 + $0x30] sm:$0xf]
        %v374 = vld [vmem:[%s321 + $0x34] sm:$0xf]
        %v375 = vld [vmem:[%s321 + $0x38] sm:$0xf]
        %v376 = vld [vmem:[%s321 + $0x3c] sm:$0xf]
        %v377 = vld [vmem:[%s321 + $0x40] sm:$0xf]
        %v378 = vld [vmem:[%s321 + $0x44] sm:$0xf]
        %v379 = vld [vmem:[%s321 + $0x48] sm:$0xf]
        %v380 = vld [vmem:[%s321 + $0x4c] sm:$0xf]
        %v381 = vld [vmem:[%s321 + $0x50] sm:$0xf]
        %v382 = vld [vmem:[%s321 + $0x54] sm:$0xf]
        %v383 = vld [vmem:[%s321 + $0x58] sm:$0xf]
        %v384 = vld [vmem:[%s321 + $0x5c] sm:$0xf]
        %v385 = vld [vmem:[%s321 + $0x60] sm:$0xf]
        %v386 = vld [vmem:[%s321 + $0x64] sm:$0xf]
        %v387 = vld [vmem:[%s321 + $0x68] sm:$0xf]
        %v388 = vld [vmem:[%s321 + $0x6c] sm:$0xf]
        %v389 = vld [vmem:[%s321 + $0x70] sm:$0xf]
        %v390 = vld [vmem:[%s321 + $0x74] sm:$0xf]
        %v391 = vld [vmem:[%s321 + $0x78] sm:$0xf]
        %v392 = vld [vmem:[%s321 + $0x7c] sm:$0xf]
        %v393 = vld [vmem:[%s3] sm:$0x1]
        %v394 = vld [vmem:[%s4] sm:$0x1]
        %v395 = vld [vmem:[%s5] sm:$0x1]
        %v397 = vpack.i.b16 %v393, %v393
        %v399 = vlaneseq
        %v400 = vshrl.u32 %v399, 7
        %v401 = vsub.s32 0, %v400
        %v402 = vrot.slane %v397, %v401
        %v404 = vunpack.c.l.b16 %v402
        %v405 = vpack.c.b16 %v404, %v404
        %v407 = vmul.bf16 %v325, %v405
        %v408 = vmul.bf16 %v326, %v405
        %v409 = vmul.bf16 %v327, %v405
        %v410 = vmul.bf16 %v328, %v405
        %v411 = vunpack.c.l.bf16 %v407
        %v412 = vunpack.c.l.bf16 %v408
        %v413 = vunpack.c.l.bf16 %v409
        %v414 = vunpack.c.l.bf16 %v410
        %vm415 = vcmask 523264
        %v416 = vsel %vm415, %v411, 0.0
        %417 = vadd.xlane.f32.xlu0 %v416
        %v418 = vpop.xlane.xlu0 %417
        %v419 = vsel %vm415, %v412, 0.0
        %420 = vadd.xlane.f32.xlu0 %v419
        %v421 = vpop.xlane.xlu0 %420
        %v422 = vsel %vm415, %v413, 0.0
        %423 = vadd.xlane.f32.xlu0 %v422
        %v424 = vpop.xlane.xlu0 %423
        %v425 = vsel %vm415, %v414, 0.0
        %426 = vadd.xlane.f32.xlu0 %v425
        %v427 = vpop.xlane.xlu0 %426
        %v429 = vpack.i.b16 %v394, %v394
        %v431 = vlaneseq
        %v432 = vshrl.u32 %v431, 7
        %v433 = vsub.s32 0, %v432
        %v434 = vrot.slane %v429, %v433
        %v435 = vmul.bf16 %v329, %v434
        %v436 = vmul.bf16 %v330, %v434
        %v437 = vmul.bf16 %v331, %v434
        %v438 = vmul.bf16 %v332, %v434
        %v439 = vmul.bf16 %v333, %v434
        %v440 = vmul.bf16 %v334, %v434
        %v441 = vmul.bf16 %v335, %v434
        %v442 = vmul.bf16 %v336, %v434
        %v443 = vmul.bf16 %v337, %v434
        %v444 = vmul.bf16 %v338, %v434
        %v445 = vmul.bf16 %v339, %v434
        %v446 = vmul.bf16 %v340, %v434
        %v447 = vmul.bf16 %v341, %v434
        %v448 = vmul.bf16 %v342, %v434
        %v449 = vmul.bf16 %v343, %v434
        %v450 = vmul.bf16 %v344, %v434
        %v451 = vmul.bf16 %v345, %v434
        %v452 = vmul.bf16 %v346, %v434
        %v453 = vmul.bf16 %v347, %v434
        %v454 = vmul.bf16 %v348, %v434
        %v455 = vmul.bf16 %v349, %v434
        %v456 = vmul.bf16 %v350, %v434
        %v457 = vmul.bf16 %v351, %v434
        %v458 = vmul.bf16 %v352, %v434
        %v459 = vmul.bf16 %v353, %v434
        %v460 = vmul.bf16 %v354, %v434
        %v461 = vmul.bf16 %v355, %v434
        %v462 = vmul.bf16 %v356, %v434
        %v463 = vmul.bf16 %v357, %v434
        %v464 = vmul.bf16 %v358, %v434
        %v465 = vmul.bf16 %v359, %v434
        %v466 = vmul.bf16 %v360, %v434
        %v467 = vunpack.c.l.bf16 %v435
        %v468 = vunpack.c.l.bf16 %v436
        %v469 = vunpack.c.l.bf16 %v437
        %v470 = vunpack.c.l.bf16 %v438
        %v471 = vunpack.c.l.bf16 %v439
        %v472 = vunpack.c.l.bf16 %v440
        %v473 = vunpack.c.l.bf16 %v441
        %v474 = vunpack.c.l.bf16 %v442
        %v475 = vunpack.c.l.bf16 %v443
        %v476 = vunpack.c.l.bf16 %v444
        %v477 = vunpack.c.l.bf16 %v445
        %v478 = vunpack.c.l.bf16 %v446
        %v479 = vunpack.c.l.bf16 %v447
        %v480 = vunpack.c.l.bf16 %v448
        %v481 = vunpack.c.l.bf16 %v449
        %v482 = vunpack.c.l.bf16 %v450
        %v483 = vunpack.c.l.bf16 %v451
        %v484 = vunpack.c.l.bf16 %v452
        %v485 = vunpack.c.l.bf16 %v453
        %v486 = vunpack.c.l.bf16 %v454
        %v487 = vunpack.c.l.bf16 %v455
        %v488 = vunpack.c.l.bf16 %v456
        %v489 = vunpack.c.l.bf16 %v457
        %v490 = vunpack.c.l.bf16 %v458
        %v491 = vunpack.c.l.bf16 %v459
        %v492 = vunpack.c.l.bf16 %v460
        %v493 = vunpack.c.l.bf16 %v461
        %v494 = vunpack.c.l.bf16 %v462
        %v495 = vunpack.c.l.bf16 %v463
        %v496 = vunpack.c.l.bf16 %v464
        %v497 = vunpack.c.l.bf16 %v465
        %v498 = vunpack.c.l.bf16 %v466
        %v499 = vsel %vm415, %v467, 0.0
        %500 = vadd.xlane.f32.xlu0 %v499
        %v501 = vpop.xlane.xlu0 %500
        %v502 = vsel %vm415, %v468, 0.0
        %503 = vadd.xlane.f32.xlu0 %v502
        %v504 = vpop.xlane.xlu0 %503
        %v505 = vsel %vm415, %v469, 0.0
        %506 = vadd.xlane.f32.xlu0 %v505
        %v507 = vpop.xlane.xlu0 %506
        %v508 = vsel %vm415, %v470, 0.0
        %509 = vadd.xlane.f32.xlu0 %v508
        %v510 = vpop.xlane.xlu0 %509
        %v511 = vsel %vm415, %v471, 0.0
        %512 = vadd.xlane.f32.xlu0 %v511
        %v513 = vpop.xlane.xlu0 %512
        %v514 = vsel %vm415, %v472, 0.0
        %515 = vadd.xlane.f32.xlu0 %v514
        %v516 = vpop.xlane.xlu0 %515
        %v517 = vsel %vm415, %v473, 0.0
        %518 = vadd.xlane.f32.xlu0 %v517
        %v519 = vpop.xlane.xlu0 %518
        %v520 = vsel %vm415, %v474, 0.0
        %521 = vadd.xlane.f32.xlu0 %v520
        %v522 = vpop.xlane.xlu0 %521
        %v523 = vsel %vm415, %v475, 0.0
        %524 = vadd.xlane.f32.xlu0 %v523
        %v525 = vpop.xlane.xlu0 %524
        %v526 = vsel %vm415, %v476, 0.0
        %527 = vadd.xlane.f32.xlu0 %v526
        %v528 = vpop.xlane.xlu0 %527
        %v529 = vsel %vm415, %v477, 0.0
        %530 = vadd.xlane.f32.xlu0 %v529
        %v531 = vpop.xlane.xlu0 %530
        %v532 = vsel %vm415, %v478, 0.0
        %533 = vadd.xlane.f32.xlu0 %v532
        %v534 = vpop.xlane.xlu0 %533
        %v535 = vsel %vm415, %v479, 0.0
        %536 = vadd.xlane.f32.xlu0 %v535
        %v537 = vpop.xlane.xlu0 %536
        %v538 = vsel %vm415, %v480, 0.0
        %539 = vadd.xlane.f32.xlu0 %v538
        %v540 = vpop.xlane.xlu0 %539
        %v541 = vsel %vm415, %v481, 0.0
        %542 = vadd.xlane.f32.xlu0 %v541
        %v543 = vpop.xlane.xlu0 %542
        %v544 = vsel %vm415, %v482, 0.0
        %545 = vadd.xlane.f32.xlu0 %v544
        %v546 = vpop.xlane.xlu0 %545
        %v547 = vsel %vm415, %v483, 0.0
        %548 = vadd.xlane.f32.xlu0 %v547
        %v549 = vpop.xlane.xlu0 %548
        %v550 = vsel %vm415, %v484, 0.0
        %551 = vadd.xlane.f32.xlu0 %v550
        %v552 = vpop.xlane.xlu0 %551
        %v553 = vsel %vm415, %v485, 0.0
        %554 = vadd.xlane.f32.xlu0 %v553
        %v555 = vpop.xlane.xlu0 %554
        %v556 = vsel %vm415, %v486, 0.0
        %557 = vadd.xlane.f32.xlu0 %v556
        %v558 = vpop.xlane.xlu0 %557
        %v559 = vsel %vm415, %v487, 0.0
        %560 = vadd.xlane.f32.xlu0 %v559
        %v561 = vpop.xlane.xlu0 %560
        %v562 = vsel %vm415, %v488, 0.0
        %563 = vadd.xlane.f32.xlu0 %v562
        %v564 = vpop.xlane.xlu0 %563
        %v565 = vsel %vm415, %v489, 0.0
        %566 = vadd.xlane.f32.xlu0 %v565
        %v567 = vpop.xlane.xlu0 %566
        %v568 = vsel %vm415, %v490, 0.0
        %569 = vadd.xlane.f32.xlu0 %v568
        %v570 = vpop.xlane.xlu0 %569
        %v571 = vsel %vm415, %v491, 0.0
        %572 = vadd.xlane.f32.xlu0 %v571
        %v573 = vpop.xlane.xlu0 %572
        %v574 = vsel %vm415, %v492, 0.0
        %575 = vadd.xlane.f32.xlu0 %v574
        %v576 = vpop.xlane.xlu0 %575
        %v577 = vsel %vm415, %v493, 0.0
        %578 = vadd.xlane.f32.xlu0 %v577
        %v579 = vpop.xlane.xlu0 %578
        %v580 = vsel %vm415, %v494, 0.0
        %581 = vadd.xlane.f32.xlu0 %v580
        %v582 = vpop.xlane.xlu0 %581
        %v583 = vsel %vm415, %v495, 0.0
        %584 = vadd.xlane.f32.xlu0 %v583
        %v585 = vpop.xlane.xlu0 %584
        %v586 = vsel %vm415, %v496, 0.0
        %587 = vadd.xlane.f32.xlu0 %v586
        %v588 = vpop.xlane.xlu0 %587
        %v589 = vsel %vm415, %v497, 0.0
        %590 = vadd.xlane.f32.xlu0 %v589
        %v591 = vpop.xlane.xlu0 %590
        %v592 = vsel %vm415, %v498, 0.0
        %593 = vadd.xlane.f32.xlu0 %v592
        %v594 = vpop.xlane.xlu0 %593
        %v596 = vpack.i.b16 %v395, %v395
        %v598 = vlaneseq
        %v599 = vshrl.u32 %v598, 7
        %v600 = vsub.s32 0, %v599
        %v601 = vrot.slane %v596, %v600
        %v602 = vmul.bf16 %v361, %v601
        %v603 = vmul.bf16 %v362, %v601
        %v604 = vmul.bf16 %v363, %v601
        %v605 = vmul.bf16 %v364, %v601
        %v606 = vmul.bf16 %v365, %v601
        %v607 = vmul.bf16 %v366, %v601
        %v608 = vmul.bf16 %v367, %v601
        %v609 = vmul.bf16 %v368, %v601
        %v610 = vmul.bf16 %v369, %v601
        %v611 = vmul.bf16 %v370, %v601
        %v612 = vmul.bf16 %v371, %v601
        %v613 = vmul.bf16 %v372, %v601
        %v614 = vmul.bf16 %v373, %v601
        %v615 = vmul.bf16 %v374, %v601
        %v616 = vmul.bf16 %v375, %v601
        %v617 = vmul.bf16 %v376, %v601
        %v618 = vmul.bf16 %v377, %v601
        %v619 = vmul.bf16 %v378, %v601
        %v620 = vmul.bf16 %v379, %v601
        %v621 = vmul.bf16 %v380, %v601
        %v622 = vmul.bf16 %v381, %v601
        %v623 = vmul.bf16 %v382, %v601
        %v624 = vmul.bf16 %v383, %v601
        %v625 = vmul.bf16 %v384, %v601
        %v626 = vmul.bf16 %v385, %v601
        %v627 = vmul.bf16 %v386, %v601
        %v628 = vmul.bf16 %v387, %v601
        %v629 = vmul.bf16 %v388, %v601
        %v630 = vmul.bf16 %v389, %v601
        %v631 = vmul.bf16 %v390, %v601
        %v632 = vmul.bf16 %v391, %v601
        %v633 = vmul.bf16 %v392, %v601
        %v634 = vunpack.c.l.bf16 %v602
        %v635 = vunpack.c.l.bf16 %v603
        %v636 = vunpack.c.l.bf16 %v604
        %v637 = vunpack.c.l.bf16 %v605
        %v638 = vunpack.c.l.bf16 %v606
        %v639 = vunpack.c.l.bf16 %v607
        %v640 = vunpack.c.l.bf16 %v608
        %v641 = vunpack.c.l.bf16 %v609
        %v642 = vunpack.c.l.bf16 %v610
        %v643 = vunpack.c.l.bf16 %v611
        %v644 = vunpack.c.l.bf16 %v612
        %v645 = vunpack.c.l.bf16 %v613
        %v646 = vunpack.c.l.bf16 %v614
        %v647 = vunpack.c.l.bf16 %v615
        %v648 = vunpack.c.l.bf16 %v616
        %v649 = vunpack.c.l.bf16 %v617
        %v650 = vunpack.c.l.bf16 %v618
        %v651 = vunpack.c.l.bf16 %v619
        %v652 = vunpack.c.l.bf16 %v620
        %v653 = vunpack.c.l.bf16 %v621
        %v654 = vunpack.c.l.bf16 %v622
        %v655 = vunpack.c.l.bf16 %v623
        %v656 = vunpack.c.l.bf16 %v624
        %v657 = vunpack.c.l.bf16 %v625
        %v658 = vunpack.c.l.bf16 %v626
        %v659 = vunpack.c.l.bf16 %v627
        %v660 = vunpack.c.l.bf16 %v628
        %v661 = vunpack.c.l.bf16 %v629
        %v662 = vunpack.c.l.bf16 %v630
        %v663 = vunpack.c.l.bf16 %v631
        %v664 = vunpack.c.l.bf16 %v632
        %v665 = vunpack.c.l.bf16 %v633
        %vm666 = vcmask 261120
        %v667 = vsel %vm666, %v634, 0.0
        %668 = vadd.xlane.f32.xlu0 %v667
        %v669 = vpop.xlane.xlu0 %668
        %v670 = vsel %vm666, %v635, 0.0
        %671 = vadd.xlane.f32.xlu0 %v670
        %v672 = vpop.xlane.xlu0 %671
        %v673 = vsel %vm666, %v636, 0.0
        %674 = vadd.xlane.f32.xlu0 %v673
        %v675 = vpop.xlane.xlu0 %674
        %v676 = vsel %vm666, %v637, 0.0
        %677 = vadd.xlane.f32.xlu0 %v676
        %v678 = vpop.xlane.xlu0 %677
        %v679 = vsel %vm666, %v638, 0.0
        %680 = vadd.xlane.f32.xlu0 %v679
        %v681 = vpop.xlane.xlu0 %680
        %v682 = vsel %vm666, %v639, 0.0
        %683 = vadd.xlane.f32.xlu0 %v682
        %v684 = vpop.xlane.xlu0 %683
        %v685 = vsel %vm666, %v640, 0.0
        %686 = vadd.xlane.f32.xlu0 %v685
        %v687 = vpop.xlane.xlu0 %686
        %v688 = vsel %vm666, %v641, 0.0
        %689 = vadd.xlane.f32.xlu0 %v688
        %v690 = vpop.xlane.xlu0 %689
        %v691 = vsel %vm666, %v642, 0.0
        %692 = vadd.xlane.f32.xlu0 %v691
        %v693 = vpop.xlane.xlu0 %692
        %v694 = vsel %vm666, %v643, 0.0
        %695 = vadd.xlane.f32.xlu0 %v694
        %v696 = vpop.xlane.xlu0 %695
        %v697 = vsel %vm666, %v644, 0.0
        %698 = vadd.xlane.f32.xlu0 %v697
        %v699 = vpop.xlane.xlu0 %698
        %v700 = vsel %vm666, %v645, 0.0
        %701 = vadd.xlane.f32.xlu0 %v700
        %v702 = vpop.xlane.xlu0 %701
        %v703 = vsel %vm666, %v646, 0.0
        %704 = vadd.xlane.f32.xlu0 %v703
        %v705 = vpop.xlane.xlu0 %704
        %v706 = vsel %vm666, %v647, 0.0
        %707 = vadd.xlane.f32.xlu0 %v706
        %v708 = vpop.xlane.xlu0 %707
        %v709 = vsel %vm666, %v648, 0.0
        %710 = vadd.xlane.f32.xlu0 %v709
        %v711 = vpop.xlane.xlu0 %710
        %v712 = vsel %vm666, %v649, 0.0
        %713 = vadd.xlane.f32.xlu0 %v712
        %v714 = vpop.xlane.xlu0 %713
        %v715 = vsel %vm666, %v650, 0.0
        %716 = vadd.xlane.f32.xlu0 %v715
        %v717 = vpop.xlane.xlu0 %716
        %v718 = vsel %vm666, %v651, 0.0
        %719 = vadd.xlane.f32.xlu0 %v718
        %v720 = vpop.xlane.xlu0 %719
        %v721 = vsel %vm666, %v652, 0.0
        %722 = vadd.xlane.f32.xlu0 %v721
        %v723 = vpop.xlane.xlu0 %722
        %v724 = vsel %vm666, %v653, 0.0
        %725 = vadd.xlane.f32.xlu0 %v724
        %v726 = vpop.xlane.xlu0 %725
        %v727 = vsel %vm666, %v654, 0.0
        %728 = vadd.xlane.f32.xlu0 %v727
        %v729 = vpop.xlane.xlu0 %728
        %v730 = vsel %vm666, %v655, 0.0
        %731 = vadd.xlane.f32.xlu0 %v730
        %v732 = vpop.xlane.xlu0 %731
        %v733 = vsel %vm666, %v656, 0.0
        %734 = vadd.xlane.f32.xlu0 %v733
        %v735 = vpop.xlane.xlu0 %734
        %v736 = vsel %vm666, %v657, 0.0
        %737 = vadd.xlane.f32.xlu0 %v736
        %v738 = vpop.xlane.xlu0 %737
        %v739 = vsel %vm666, %v658, 0.0
        %740 = vadd.xlane.f32.xlu0 %v739
        %v741 = vpop.xlane.xlu0 %740
        %v742 = vsel %vm666, %v659, 0.0
        %743 = vadd.xlane.f32.xlu0 %v742
        %v744 = vpop.xlane.xlu0 %743
        %v745 = vsel %vm666, %v660, 0.0
        %746 = vadd.xlane.f32.xlu0 %v745
        %v747 = vpop.xlane.xlu0 %746
        %v748 = vsel %vm666, %v661, 0.0
        %749 = vadd.xlane.f32.xlu0 %v748
        %v750 = vpop.xlane.xlu0 %749
        %v751 = vsel %vm666, %v662, 0.0
        %752 = vadd.xlane.f32.xlu0 %v751
        %v753 = vpop.xlane.xlu0 %752
        %v754 = vsel %vm666, %v663, 0.0
        %755 = vadd.xlane.f32.xlu0 %v754
        %v756 = vpop.xlane.xlu0 %755
        %v757 = vsel %vm666, %v664, 0.0
        %758 = vadd.xlane.f32.xlu0 %v757
        %v759 = vpop.xlane.xlu0 %758
        %v760 = vsel %vm666, %v665, 0.0
        %761 = vadd.xlane.f32.xlu0 %v760
        %v762 = vpop.xlane.xlu0 %761
        %v763 = vadd.f32 %v501, %v669
        %v764 = vadd.f32 %v504, %v672
        %v765 = vadd.f32 %v507, %v675
        %v766 = vadd.f32 %v510, %v678
        %v767 = vadd.f32 %v513, %v681
        %v768 = vadd.f32 %v516, %v684
        %v769 = vadd.f32 %v519, %v687
        %v770 = vadd.f32 %v522, %v690
        %v771 = vadd.f32 %v525, %v693
        %v772 = vadd.f32 %v528, %v696
        %v773 = vadd.f32 %v531, %v699
        %v774 = vadd.f32 %v534, %v702
        %v775 = vadd.f32 %v537, %v705
        %v776 = vadd.f32 %v540, %v708
        %v777 = vadd.f32 %v543, %v711
        %v778 = vadd.f32 %v546, %v714
        %v779 = vadd.f32 %v549, %v717
        %v780 = vadd.f32 %v552, %v720
        %v781 = vadd.f32 %v555, %v723
        %v782 = vadd.f32 %v558, %v726
        %v783 = vadd.f32 %v561, %v729
        %v784 = vadd.f32 %v564, %v732
        %v785 = vadd.f32 %v567, %v735
        %v786 = vadd.f32 %v570, %v738
        %v787 = vadd.f32 %v573, %v741
        %v788 = vadd.f32 %v576, %v744
        %v789 = vadd.f32 %v579, %v747
        %v790 = vadd.f32 %v582, %v750
        %v791 = vadd.f32 %v585, %v753
        %v792 = vadd.f32 %v588, %v756
        %v793 = vadd.f32 %v591, %v759
        %v794 = vadd.f32 %v594, %v762
        %v799 = vlaneseq
        %v800 = vshrl.u32 %v799, 7
        %v801 = vsub.s32 0, %v800
        %v802 = vrot.slane %v418, %v801
        %v803 = vlaneseq
        %v804 = vshrl.u32 %v803, 7
        %v805 = vsub.s32 1, %v804
        %v806 = vrot.slane %v418, %v805
        %v807 = vlaneseq
        %v808 = vshrl.u32 %v807, 7
        %v809 = vsub.s32 2, %v808
        %v810 = vrot.slane %v418, %v809
        %v811 = vlaneseq
        %v812 = vshrl.u32 %v811, 7
        %v813 = vsub.s32 3, %v812
        %v814 = vrot.slane %v418, %v813
        %v815 = vlaneseq
        %v816 = vshrl.u32 %v815, 7
        %v817 = vsub.s32 4, %v816
        %v818 = vrot.slane %v418, %v817
        %v819 = vlaneseq
        %v820 = vshrl.u32 %v819, 7
        %v821 = vsub.s32 5, %v820
        %v822 = vrot.slane %v418, %v821
        %v823 = vlaneseq
        %v824 = vshrl.u32 %v823, 7
        %v825 = vsub.s32 6, %v824
        %v826 = vrot.slane %v418, %v825
        %v827 = vlaneseq
        %v828 = vshrl.u32 %v827, 7
        %v829 = vsub.s32 7, %v828
        %v830 = vrot.slane %v418, %v829
        %v831 = vlaneseq
        %v832 = vshrl.u32 %v831, 7
        %v833 = vsub.s32 0, %v832
        %v834 = vrot.slane %v421, %v833
        %v835 = vlaneseq
        %v836 = vshrl.u32 %v835, 7
        %v837 = vsub.s32 1, %v836
        %v838 = vrot.slane %v421, %v837
        %v839 = vlaneseq
        %v840 = vshrl.u32 %v839, 7
        %v841 = vsub.s32 2, %v840
        %v842 = vrot.slane %v421, %v841
        %v843 = vlaneseq
        %v844 = vshrl.u32 %v843, 7
        %v845 = vsub.s32 3, %v844
        %v846 = vrot.slane %v421, %v845
        %v847 = vlaneseq
        %v848 = vshrl.u32 %v847, 7
        %v849 = vsub.s32 4, %v848
        %v850 = vrot.slane %v421, %v849
        %v851 = vlaneseq
        %v852 = vshrl.u32 %v851, 7
        %v853 = vsub.s32 5, %v852
        %v854 = vrot.slane %v421, %v853
        %v855 = vlaneseq
        %v856 = vshrl.u32 %v855, 7
        %v857 = vsub.s32 6, %v856
        %v858 = vrot.slane %v421, %v857
        %v859 = vlaneseq
        %v860 = vshrl.u32 %v859, 7
        %v861 = vsub.s32 7, %v860
        %v862 = vrot.slane %v421, %v861
        %v863 = vlaneseq
        %v864 = vshrl.u32 %v863, 7
        %v865 = vsub.s32 0, %v864
        %v866 = vrot.slane %v424, %v865
        %v867 = vlaneseq
        %v868 = vshrl.u32 %v867, 7
        %v869 = vsub.s32 1, %v868
        %v870 = vrot.slane %v424, %v869
        %v871 = vlaneseq
        %v872 = vshrl.u32 %v871, 7
        %v873 = vsub.s32 2, %v872
        %v874 = vrot.slane %v424, %v873
        %v875 = vlaneseq
        %v876 = vshrl.u32 %v875, 7
        %v877 = vsub.s32 3, %v876
        %v878 = vrot.slane %v424, %v877
        %v879 = vlaneseq
        %v880 = vshrl.u32 %v879, 7
        %v881 = vsub.s32 4, %v880
        %v882 = vrot.slane %v424, %v881
        %v883 = vlaneseq
        %v884 = vshrl.u32 %v883, 7
        %v885 = vsub.s32 5, %v884
        %v886 = vrot.slane %v424, %v885
        %v887 = vlaneseq
        %v888 = vshrl.u32 %v887, 7
        %v889 = vsub.s32 6, %v888
        %v890 = vrot.slane %v424, %v889
        %v891 = vlaneseq
        %v892 = vshrl.u32 %v891, 7
        %v893 = vsub.s32 7, %v892
        %v894 = vrot.slane %v424, %v893
        %v895 = vlaneseq
        %v896 = vshrl.u32 %v895, 7
        %v897 = vsub.s32 0, %v896
        %v898 = vrot.slane %v427, %v897
        %v899 = vlaneseq
        %v900 = vshrl.u32 %v899, 7
        %v901 = vsub.s32 1, %v900
        %v902 = vrot.slane %v427, %v901
        %v903 = vlaneseq
        %v904 = vshrl.u32 %v903, 7
        %v905 = vsub.s32 2, %v904
        %v906 = vrot.slane %v427, %v905
        %v907 = vlaneseq
        %v908 = vshrl.u32 %v907, 7
        %v909 = vsub.s32 3, %v908
        %v910 = vrot.slane %v427, %v909
        %v911 = vlaneseq
        %v912 = vshrl.u32 %v911, 7
        %v913 = vsub.s32 4, %v912
        %v914 = vrot.slane %v427, %v913
        %v915 = vlaneseq
        %v916 = vshrl.u32 %v915, 7
        %v917 = vsub.s32 5, %v916
        %v918 = vrot.slane %v427, %v917
        %v919 = vlaneseq
        %v920 = vshrl.u32 %v919, 7
        %v921 = vsub.s32 6, %v920
        %v922 = vrot.slane %v427, %v921
        %v923 = vlaneseq
        %v924 = vshrl.u32 %v923, 7
        %v925 = vsub.s32 7, %v924
        %v926 = vrot.slane %v427, %v925
        %v959 = vadd.f32 %v802, %v763
        %v960 = vadd.f32 %v806, %v764
        %v961 = vadd.f32 %v810, %v765
        %v962 = vadd.f32 %v814, %v766
        %v963 = vadd.f32 %v818, %v767
        %v964 = vadd.f32 %v822, %v768
        %v965 = vadd.f32 %v826, %v769
        %v966 = vadd.f32 %v830, %v770
        %v967 = vadd.f32 %v834, %v771
        %v968 = vadd.f32 %v838, %v772
        %v969 = vadd.f32 %v842, %v773
        %v970 = vadd.f32 %v846, %v774
        %v971 = vadd.f32 %v850, %v775
        %v972 = vadd.f32 %v854, %v776
        %v973 = vadd.f32 %v858, %v777
        %v974 = vadd.f32 %v862, %v778
        %v975 = vadd.f32 %v866, %v779
        %v976 = vadd.f32 %v870, %v780
        %v977 = vadd.f32 %v874, %v781
        %v978 = vadd.f32 %v878, %v782
        %v979 = vadd.f32 %v882, %v783
        %v980 = vadd.f32 %v886, %v784
        %v981 = vadd.f32 %v890, %v785
        %v982 = vadd.f32 %v894, %v786
        %v983 = vadd.f32 %v898, %v787
        %v984 = vadd.f32 %v902, %v788
        %v985 = vadd.f32 %v906, %v789
        %v986 = vadd.f32 %v910, %v790
        %v987 = vadd.f32 %v914, %v791
        %v988 = vadd.f32 %v918, %v792
        %v989 = vadd.f32 %v922, %v793
        %v990 = vadd.f32 %v926, %v794
        %vm991 = vcmp.ge.f32.partialorder %v959, 0.0
        %vm992 = vcmp.ge.f32.partialorder %v960, 0.0
        %vm993 = vcmp.ge.f32.partialorder %v961, 0.0
        %vm994 = vcmp.ge.f32.partialorder %v962, 0.0
        %vm995 = vcmp.ge.f32.partialorder %v963, 0.0
        %vm996 = vcmp.ge.f32.partialorder %v964, 0.0
        %vm997 = vcmp.ge.f32.partialorder %v965, 0.0
        %vm998 = vcmp.ge.f32.partialorder %v966, 0.0
        %vm999 = vcmp.ge.f32.partialorder %v967, 0.0
        %vm1000 = vcmp.ge.f32.partialorder %v968, 0.0
        %vm1001 = vcmp.ge.f32.partialorder %v969, 0.0
        %vm1002 = vcmp.ge.f32.partialorder %v970, 0.0
        %vm1003 = vcmp.ge.f32.partialorder %v971, 0.0
        %vm1004 = vcmp.ge.f32.partialorder %v972, 0.0
        %vm1005 = vcmp.ge.f32.partialorder %v973, 0.0
        %vm1006 = vcmp.ge.f32.partialorder %v974, 0.0
        %vm1007 = vcmp.ge.f32.partialorder %v975, 0.0
        %vm1008 = vcmp.ge.f32.partialorder %v976, 0.0
        %vm1009 = vcmp.ge.f32.partialorder %v977, 0.0
        %vm1010 = vcmp.ge.f32.partialorder %v978, 0.0
        %vm1011 = vcmp.ge.f32.partialorder %v979, 0.0
        %vm1012 = vcmp.ge.f32.partialorder %v980, 0.0
        %vm1013 = vcmp.ge.f32.partialorder %v981, 0.0
        %vm1014 = vcmp.ge.f32.partialorder %v982, 0.0
        %vm1015 = vcmp.ge.f32.partialorder %v983, 0.0
        %vm1016 = vcmp.ge.f32.partialorder %v984, 0.0
        %vm1017 = vcmp.ge.f32.partialorder %v985, 0.0
        %vm1018 = vcmp.ge.f32.partialorder %v986, 0.0
        %vm1019 = vcmp.ge.f32.partialorder %v987, 0.0
        %vm1020 = vcmp.ge.f32.partialorder %v988, 0.0
        %vm1021 = vcmp.ge.f32.partialorder %v989, 0.0
        %vm1022 = vcmp.ge.f32.partialorder %v990, 0.0
        %v1023 = vmul.f32 %v959, 0.01
        %v1024 = vmul.f32 %v960, 0.01
        %v1025 = vmul.f32 %v961, 0.01
        %v1026 = vmul.f32 %v962, 0.01
        %v1027 = vmul.f32 %v963, 0.01
        %v1028 = vmul.f32 %v964, 0.01
        %v1029 = vmul.f32 %v965, 0.01
        %v1030 = vmul.f32 %v966, 0.01
        %v1031 = vmul.f32 %v967, 0.01
        %v1032 = vmul.f32 %v968, 0.01
        %v1033 = vmul.f32 %v969, 0.01
        %v1034 = vmul.f32 %v970, 0.01
        %v1035 = vmul.f32 %v971, 0.01
        %v1036 = vmul.f32 %v972, 0.01
        %v1037 = vmul.f32 %v973, 0.01
        %v1038 = vmul.f32 %v974, 0.01
        %v1039 = vmul.f32 %v975, 0.01
        %v1040 = vmul.f32 %v976, 0.01
        %v1041 = vmul.f32 %v977, 0.01
        %v1042 = vmul.f32 %v978, 0.01
        %v1043 = vmul.f32 %v979, 0.01
        %v1044 = vmul.f32 %v980, 0.01
        %v1045 = vmul.f32 %v981, 0.01
        %v1046 = vmul.f32 %v982, 0.01
        %v1047 = vmul.f32 %v983, 0.01
        %v1048 = vmul.f32 %v984, 0.01
        %v1049 = vmul.f32 %v985, 0.01
        %v1050 = vmul.f32 %v986, 0.01
        %v1051 = vmul.f32 %v987, 0.01
        %v1052 = vmul.f32 %v988, 0.01
        %v1053 = vmul.f32 %v989, 0.01
        %v1054 = vmul.f32 %v990, 0.01
        %v1055 = vsel %vm991, %v959, %v1023
        %v1056 = vsel %vm992, %v960, %v1024
        %v1057 = vsel %vm993, %v961, %v1025
        %v1058 = vsel %vm994, %v962, %v1026
        %v1059 = vsel %vm995, %v963, %v1027
        %v1060 = vsel %vm996, %v964, %v1028
        %v1061 = vsel %vm997, %v965, %v1029
        %v1062 = vsel %vm998, %v966, %v1030
        %v1063 = vsel %vm999, %v967, %v1031
        %v1064 = vsel %vm1000, %v968, %v1032
        %v1065 = vsel %vm1001, %v969, %v1033
        %v1066 = vsel %vm1002, %v970, %v1034
        %v1067 = vsel %vm1003, %v971, %v1035
        %v1068 = vsel %vm1004, %v972, %v1036
        %v1069 = vsel %vm1005, %v973, %v1037
        %v1070 = vsel %vm1006, %v974, %v1038
        %v1071 = vsel %vm1007, %v975, %v1039
        %v1072 = vsel %vm1008, %v976, %v1040
        %v1073 = vsel %vm1009, %v977, %v1041
        %v1074 = vsel %vm1010, %v978, %v1042
        %v1075 = vsel %vm1011, %v979, %v1043
        %v1076 = vsel %vm1012, %v980, %v1044
        %v1077 = vsel %vm1013, %v981, %v1045
        %v1078 = vsel %vm1014, %v982, %v1046
        %v1079 = vsel %vm1015, %v983, %v1047
        %v1080 = vsel %vm1016, %v984, %v1048
        %v1081 = vsel %vm1017, %v985, %v1049
        %v1082 = vsel %vm1018, %v986, %v1050
        %v1083 = vsel %vm1019, %v987, %v1051
        %v1084 = vsel %vm1020, %v988, %v1052
        %v1085 = vsel %vm1021, %v989, %v1053
        %v1086 = vsel %vm1022, %v990, %v1054
        %v1087 = vrot.slane %v1055, 4
        %v1088 = vmax.f32 %v1055, %v1087
        %v1089 = vrot.slane %v1088, 2
        %v1090 = vmax.f32 %v1088, %v1089
        %v1091 = vrot.slane %v1090, 1
        %v1092 = vmax.f32 %v1090, %v1091
        %v1093 = vrot.slane %v1056, 4
        %v1094 = vmax.f32 %v1056, %v1093
        %v1095 = vrot.slane %v1094, 2
        %v1096 = vmax.f32 %v1094, %v1095
        %v1097 = vrot.slane %v1096, 1
        %v1098 = vmax.f32 %v1096, %v1097
        %v1099 = vrot.slane %v1057, 4
        %v1100 = vmax.f32 %v1057, %v1099
        %v1101 = vrot.slane %v1100, 2
        %v1102 = vmax.f32 %v1100, %v1101
        %v1103 = vrot.slane %v1102, 1
        %v1104 = vmax.f32 %v1102, %v1103
        %v1105 = vrot.slane %v1058, 4
        %v1106 = vmax.f32 %v1058, %v1105
        %v1107 = vrot.slane %v1106, 2
        %v1108 = vmax.f32 %v1106, %v1107
        %v1109 = vrot.slane %v1108, 1
        %v1110 = vmax.f32 %v1108, %v1109
        %v1111 = vrot.slane %v1059, 4
        %v1112 = vmax.f32 %v1059, %v1111
        %v1113 = vrot.slane %v1112, 2
        %v1114 = vmax.f32 %v1112, %v1113
        %v1115 = vrot.slane %v1114, 1
        %v1116 = vmax.f32 %v1114, %v1115
        %v1117 = vrot.slane %v1060, 4
        %v1118 = vmax.f32 %v1060, %v1117
        %v1119 = vrot.slane %v1118, 2
        %v1120 = vmax.f32 %v1118, %v1119
        %v1121 = vrot.slane %v1120, 1
        %v1122 = vmax.f32 %v1120, %v1121
        %v1123 = vrot.slane %v1061, 4
        %v1124 = vmax.f32 %v1061, %v1123
        %v1125 = vrot.slane %v1124, 2
        %v1126 = vmax.f32 %v1124, %v1125
        %v1127 = vrot.slane %v1126, 1
        %v1128 = vmax.f32 %v1126, %v1127
        %v1129 = vrot.slane %v1062, 4
        %v1130 = vmax.f32 %v1062, %v1129
        %v1131 = vrot.slane %v1130, 2
        %v1132 = vmax.f32 %v1130, %v1131
        %v1133 = vrot.slane %v1132, 1
        %v1134 = vmax.f32 %v1132, %v1133
        %v1135 = vrot.slane %v1063, 4
        %v1136 = vmax.f32 %v1063, %v1135
        %v1137 = vrot.slane %v1136, 2
        %v1138 = vmax.f32 %v1136, %v1137
        %v1139 = vrot.slane %v1138, 1
        %v1140 = vmax.f32 %v1138, %v1139
        %v1141 = vrot.slane %v1064, 4
        %v1142 = vmax.f32 %v1064, %v1141
        %v1143 = vrot.slane %v1142, 2
        %v1144 = vmax.f32 %v1142, %v1143
        %v1145 = vrot.slane %v1144, 1
        %v1146 = vmax.f32 %v1144, %v1145
        %v1147 = vrot.slane %v1065, 4
        %v1148 = vmax.f32 %v1065, %v1147
        %v1149 = vrot.slane %v1148, 2
        %v1150 = vmax.f32 %v1148, %v1149
        %v1151 = vrot.slane %v1150, 1
        %v1152 = vmax.f32 %v1150, %v1151
        %v1153 = vrot.slane %v1066, 4
        %v1154 = vmax.f32 %v1066, %v1153
        %v1155 = vrot.slane %v1154, 2
        %v1156 = vmax.f32 %v1154, %v1155
        %v1157 = vrot.slane %v1156, 1
        %v1158 = vmax.f32 %v1156, %v1157
        %v1159 = vrot.slane %v1067, 4
        %v1160 = vmax.f32 %v1067, %v1159
        %v1161 = vrot.slane %v1160, 2
        %v1162 = vmax.f32 %v1160, %v1161
        %v1163 = vrot.slane %v1162, 1
        %v1164 = vmax.f32 %v1162, %v1163
        %v1165 = vrot.slane %v1068, 4
        %v1166 = vmax.f32 %v1068, %v1165
        %v1167 = vrot.slane %v1166, 2
        %v1168 = vmax.f32 %v1166, %v1167
        %v1169 = vrot.slane %v1168, 1
        %v1170 = vmax.f32 %v1168, %v1169
        %v1171 = vrot.slane %v1069, 4
        %v1172 = vmax.f32 %v1069, %v1171
        %v1173 = vrot.slane %v1172, 2
        %v1174 = vmax.f32 %v1172, %v1173
        %v1175 = vrot.slane %v1174, 1
        %v1176 = vmax.f32 %v1174, %v1175
        %v1177 = vrot.slane %v1070, 4
        %v1178 = vmax.f32 %v1070, %v1177
        %v1179 = vrot.slane %v1178, 2
        %v1180 = vmax.f32 %v1178, %v1179
        %v1181 = vrot.slane %v1180, 1
        %v1182 = vmax.f32 %v1180, %v1181
        %v1183 = vrot.slane %v1071, 4
        %v1184 = vmax.f32 %v1071, %v1183
        %v1185 = vrot.slane %v1184, 2
        %v1186 = vmax.f32 %v1184, %v1185
        %v1187 = vrot.slane %v1186, 1
        %v1188 = vmax.f32 %v1186, %v1187
        %v1189 = vrot.slane %v1072, 4
        %v1190 = vmax.f32 %v1072, %v1189
        %v1191 = vrot.slane %v1190, 2
        %v1192 = vmax.f32 %v1190, %v1191
        %v1193 = vrot.slane %v1192, 1
        %v1194 = vmax.f32 %v1192, %v1193
        %v1195 = vrot.slane %v1073, 4
        %v1196 = vmax.f32 %v1073, %v1195
        %v1197 = vrot.slane %v1196, 2
        %v1198 = vmax.f32 %v1196, %v1197
        %v1199 = vrot.slane %v1198, 1
        %v1200 = vmax.f32 %v1198, %v1199
        %v1201 = vrot.slane %v1074, 4
        %v1202 = vmax.f32 %v1074, %v1201
        %v1203 = vrot.slane %v1202, 2
        %v1204 = vmax.f32 %v1202, %v1203
        %v1205 = vrot.slane %v1204, 1
        %v1206 = vmax.f32 %v1204, %v1205
        %v1207 = vrot.slane %v1075, 4
        %v1208 = vmax.f32 %v1075, %v1207
        %v1209 = vrot.slane %v1208, 2
        %v1210 = vmax.f32 %v1208, %v1209
        %v1211 = vrot.slane %v1210, 1
        %v1212 = vmax.f32 %v1210, %v1211
        %v1213 = vrot.slane %v1076, 4
        %v1214 = vmax.f32 %v1076, %v1213
        %v1215 = vrot.slane %v1214, 2
        %v1216 = vmax.f32 %v1214, %v1215
        %v1217 = vrot.slane %v1216, 1
        %v1218 = vmax.f32 %v1216, %v1217
        %v1219 = vrot.slane %v1077, 4
        %v1220 = vmax.f32 %v1077, %v1219
        %v1221 = vrot.slane %v1220, 2
        %v1222 = vmax.f32 %v1220, %v1221
        %v1223 = vrot.slane %v1222, 1
        %v1224 = vmax.f32 %v1222, %v1223
        %v1225 = vrot.slane %v1078, 4
        %v1226 = vmax.f32 %v1078, %v1225
        %v1227 = vrot.slane %v1226, 2
        %v1228 = vmax.f32 %v1226, %v1227
        %v1229 = vrot.slane %v1228, 1
        %v1230 = vmax.f32 %v1228, %v1229
        %v1231 = vrot.slane %v1079, 4
        %v1232 = vmax.f32 %v1079, %v1231
        %v1233 = vrot.slane %v1232, 2
        %v1234 = vmax.f32 %v1232, %v1233
        %v1235 = vrot.slane %v1234, 1
        %v1236 = vmax.f32 %v1234, %v1235
        %v1237 = vrot.slane %v1080, 4
        %v1238 = vmax.f32 %v1080, %v1237
        %v1239 = vrot.slane %v1238, 2
        %v1240 = vmax.f32 %v1238, %v1239
        %v1241 = vrot.slane %v1240, 1
        %v1242 = vmax.f32 %v1240, %v1241
        %v1243 = vrot.slane %v1081, 4
        %v1244 = vmax.f32 %v1081, %v1243
        %v1245 = vrot.slane %v1244, 2
        %v1246 = vmax.f32 %v1244, %v1245
        %v1247 = vrot.slane %v1246, 1
        %v1248 = vmax.f32 %v1246, %v1247
        %v1249 = vrot.slane %v1082, 4
        %v1250 = vmax.f32 %v1082, %v1249
        %v1251 = vrot.slane %v1250, 2
        %v1252 = vmax.f32 %v1250, %v1251
        %v1253 = vrot.slane %v1252, 1
        %v1254 = vmax.f32 %v1252, %v1253
        %v1255 = vrot.slane %v1083, 4
        %v1256 = vmax.f32 %v1083, %v1255
        %v1257 = vrot.slane %v1256, 2
        %v1258 = vmax.f32 %v1256, %v1257
        %v1259 = vrot.slane %v1258, 1
        %v1260 = vmax.f32 %v1258, %v1259
        %v1261 = vrot.slane %v1084, 4
        %v1262 = vmax.f32 %v1084, %v1261
        %v1263 = vrot.slane %v1262, 2
        %v1264 = vmax.f32 %v1262, %v1263
        %v1265 = vrot.slane %v1264, 1
        %v1266 = vmax.f32 %v1264, %v1265
        %v1267 = vrot.slane %v1085, 4
        %v1268 = vmax.f32 %v1085, %v1267
        %v1269 = vrot.slane %v1268, 2
        %v1270 = vmax.f32 %v1268, %v1269
        %v1271 = vrot.slane %v1270, 1
        %v1272 = vmax.f32 %v1270, %v1271
        %v1273 = vrot.slane %v1086, 4
        %v1274 = vmax.f32 %v1086, %v1273
        %v1275 = vrot.slane %v1274, 2
        %v1276 = vmax.f32 %v1274, %v1275
        %v1277 = vrot.slane %v1276, 1
        %v1278 = vmax.f32 %v1276, %v1277
        %v1279 = vsub.f32 %v1055, %v1092
        %v1280 = vsub.f32 %v1056, %v1098
        %v1281 = vsub.f32 %v1057, %v1104
        %v1282 = vsub.f32 %v1058, %v1110
        %v1283 = vsub.f32 %v1059, %v1116
        %v1284 = vsub.f32 %v1060, %v1122
        %v1285 = vsub.f32 %v1061, %v1128
        %v1286 = vsub.f32 %v1062, %v1134
        %v1287 = vsub.f32 %v1063, %v1140
        %v1288 = vsub.f32 %v1064, %v1146
        %v1289 = vsub.f32 %v1065, %v1152
        %v1290 = vsub.f32 %v1066, %v1158
        %v1291 = vsub.f32 %v1067, %v1164
        %v1292 = vsub.f32 %v1068, %v1170
        %v1293 = vsub.f32 %v1069, %v1176
        %v1294 = vsub.f32 %v1070, %v1182
        %v1295 = vsub.f32 %v1071, %v1188
        %v1296 = vsub.f32 %v1072, %v1194
        %v1297 = vsub.f32 %v1073, %v1200
        %v1298 = vsub.f32 %v1074, %v1206
        %v1299 = vsub.f32 %v1075, %v1212
        %v1300 = vsub.f32 %v1076, %v1218
        %v1301 = vsub.f32 %v1077, %v1224
        %v1302 = vsub.f32 %v1078, %v1230
        %v1303 = vsub.f32 %v1079, %v1236
        %v1304 = vsub.f32 %v1080, %v1242
        %v1305 = vsub.f32 %v1081, %v1248
        %v1306 = vsub.f32 %v1082, %v1254
        %v1307 = vsub.f32 %v1083, %v1260
        %v1308 = vsub.f32 %v1084, %v1266
        %v1309 = vsub.f32 %v1085, %v1272
        %v1310 = vsub.f32 %v1086, %v1278
        %v1311 = vmul.f32 %v1279, 1.442695
        %v1312 = vpow.pop %v1311
        %v1313 = vmul.f32 %v1280, 1.442695
        %v1314 = vpow.pop %v1313
        %v1315 = vmul.f32 %v1281, 1.442695
        %v1316 = vpow.pop %v1315
        %v1317 = vmul.f32 %v1282, 1.442695
        %v1318 = vpow.pop %v1317
        %v1319 = vmul.f32 %v1283, 1.442695
        %v1320 = vpow.pop %v1319
        %v1321 = vmul.f32 %v1284, 1.442695
        %v1322 = vpow.pop %v1321
        %v1323 = vmul.f32 %v1285, 1.442695
        %v1324 = vpow.pop %v1323
        %v1325 = vmul.f32 %v1286, 1.442695
        %v1326 = vpow.pop %v1325
        %v1327 = vmul.f32 %v1287, 1.442695
        %v1328 = vpow.pop %v1327
        %v1329 = vmul.f32 %v1288, 1.442695
        %v1330 = vpow.pop %v1329
        %v1331 = vmul.f32 %v1289, 1.442695
        %v1332 = vpow.pop %v1331
        %v1333 = vmul.f32 %v1290, 1.442695
        %v1334 = vpow.pop %v1333
        %v1335 = vmul.f32 %v1291, 1.442695
        %v1336 = vpow.pop %v1335
        %v1337 = vmul.f32 %v1292, 1.442695
        %v1338 = vpow.pop %v1337
        %v1339 = vmul.f32 %v1293, 1.442695
        %v1340 = vpow.pop %v1339
        %v1341 = vmul.f32 %v1294, 1.442695
        %v1342 = vpow.pop %v1341
        %v1343 = vmul.f32 %v1295, 1.442695
        %v1344 = vpow.pop %v1343
        %v1345 = vmul.f32 %v1296, 1.442695
        %v1346 = vpow.pop %v1345
        %v1347 = vmul.f32 %v1297, 1.442695
        %v1348 = vpow.pop %v1347
        %v1349 = vmul.f32 %v1298, 1.442695
        %v1350 = vpow.pop %v1349
        %v1351 = vmul.f32 %v1299, 1.442695
        %v1352 = vpow.pop %v1351
        %v1353 = vmul.f32 %v1300, 1.442695
        %v1354 = vpow.pop %v1353
        %v1355 = vmul.f32 %v1301, 1.442695
        %v1356 = vpow.pop %v1355
        %v1357 = vmul.f32 %v1302, 1.442695
        %v1358 = vpow.pop %v1357
        %v1359 = vmul.f32 %v1303, 1.442695
        %v1360 = vpow.pop %v1359
        %v1361 = vmul.f32 %v1304, 1.442695
        %v1362 = vpow.pop %v1361
        %v1363 = vmul.f32 %v1305, 1.442695
        %v1364 = vpow.pop %v1363
        %v1365 = vmul.f32 %v1306, 1.442695
        %v1366 = vpow.pop %v1365
        %v1367 = vmul.f32 %v1307, 1.442695
        %v1368 = vpow.pop %v1367
        %v1369 = vmul.f32 %v1308, 1.442695
        %v1370 = vpow.pop %v1369
        %v1371 = vmul.f32 %v1309, 1.442695
        %v1372 = vpow.pop %v1371
        %v1373 = vmul.f32 %v1310, 1.442695
        %v1374 = vpow.pop %v1373
        %v1375 = vrot.slane %v1312, 4
        %v1376 = vadd.f32 %v1312, %v1375
        %v1377 = vrot.slane %v1376, 2
        %v1378 = vadd.f32 %v1376, %v1377
        %v1379 = vrot.slane %v1378, 1
        %v1380 = vadd.f32 %v1378, %v1379
        %v1381 = vrot.slane %v1314, 4
        %v1382 = vadd.f32 %v1314, %v1381
        %v1383 = vrot.slane %v1382, 2
        %v1384 = vadd.f32 %v1382, %v1383
        %v1385 = vrot.slane %v1384, 1
        %v1386 = vadd.f32 %v1384, %v1385
        %v1387 = vrot.slane %v1316, 4
        %v1388 = vadd.f32 %v1316, %v1387
        %v1389 = vrot.slane %v1388, 2
        %v1390 = vadd.f32 %v1388, %v1389
        %v1391 = vrot.slane %v1390, 1
        %v1392 = vadd.f32 %v1390, %v1391
        %v1393 = vrot.slane %v1318, 4
        %v1394 = vadd.f32 %v1318, %v1393
        %v1395 = vrot.slane %v1394, 2
        %v1396 = vadd.f32 %v1394, %v1395
        %v1397 = vrot.slane %v1396, 1
        %v1398 = vadd.f32 %v1396, %v1397
        %v1399 = vrot.slane %v1320, 4
        %v1400 = vadd.f32 %v1320, %v1399
        %v1401 = vrot.slane %v1400, 2
        %v1402 = vadd.f32 %v1400, %v1401
        %v1403 = vrot.slane %v1402, 1
        %v1404 = vadd.f32 %v1402, %v1403
        %v1405 = vrot.slane %v1322, 4
        %v1406 = vadd.f32 %v1322, %v1405
        %v1407 = vrot.slane %v1406, 2
        %v1408 = vadd.f32 %v1406, %v1407
        %v1409 = vrot.slane %v1408, 1
        %v1410 = vadd.f32 %v1408, %v1409
        %v1411 = vrot.slane %v1324, 4
        %v1412 = vadd.f32 %v1324, %v1411
        %v1413 = vrot.slane %v1412, 2
        %v1414 = vadd.f32 %v1412, %v1413
        %v1415 = vrot.slane %v1414, 1
        %v1416 = vadd.f32 %v1414, %v1415
        %v1417 = vrot.slane %v1326, 4
        %v1418 = vadd.f32 %v1326, %v1417
        %v1419 = vrot.slane %v1418, 2
        %v1420 = vadd.f32 %v1418, %v1419
        %v1421 = vrot.slane %v1420, 1
        %v1422 = vadd.f32 %v1420, %v1421
        %v1423 = vrot.slane %v1328, 4
        %v1424 = vadd.f32 %v1328, %v1423
        %v1425 = vrot.slane %v1424, 2
        %v1426 = vadd.f32 %v1424, %v1425
        %v1427 = vrot.slane %v1426, 1
        %v1428 = vadd.f32 %v1426, %v1427
        %v1429 = vrot.slane %v1330, 4
        %v1430 = vadd.f32 %v1330, %v1429
        %v1431 = vrot.slane %v1430, 2
        %v1432 = vadd.f32 %v1430, %v1431
        %v1433 = vrot.slane %v1432, 1
        %v1434 = vadd.f32 %v1432, %v1433
        %v1435 = vrot.slane %v1332, 4
        %v1436 = vadd.f32 %v1332, %v1435
        %v1437 = vrot.slane %v1436, 2
        %v1438 = vadd.f32 %v1436, %v1437
        %v1439 = vrot.slane %v1438, 1
        %v1440 = vadd.f32 %v1438, %v1439
        %v1441 = vrot.slane %v1334, 4
        %v1442 = vadd.f32 %v1334, %v1441
        %v1443 = vrot.slane %v1442, 2
        %v1444 = vadd.f32 %v1442, %v1443
        %v1445 = vrot.slane %v1444, 1
        %v1446 = vadd.f32 %v1444, %v1445
        %v1447 = vrot.slane %v1336, 4
        %v1448 = vadd.f32 %v1336, %v1447
        %v1449 = vrot.slane %v1448, 2
        %v1450 = vadd.f32 %v1448, %v1449
        %v1451 = vrot.slane %v1450, 1
        %v1452 = vadd.f32 %v1450, %v1451
        %v1453 = vrot.slane %v1338, 4
        %v1454 = vadd.f32 %v1338, %v1453
        %v1455 = vrot.slane %v1454, 2
        %v1456 = vadd.f32 %v1454, %v1455
        %v1457 = vrot.slane %v1456, 1
        %v1458 = vadd.f32 %v1456, %v1457
        %v1459 = vrot.slane %v1340, 4
        %v1460 = vadd.f32 %v1340, %v1459
        %v1461 = vrot.slane %v1460, 2
        %v1462 = vadd.f32 %v1460, %v1461
        %v1463 = vrot.slane %v1462, 1
        %v1464 = vadd.f32 %v1462, %v1463
        %v1465 = vrot.slane %v1342, 4
        %v1466 = vadd.f32 %v1342, %v1465
        %v1467 = vrot.slane %v1466, 2
        %v1468 = vadd.f32 %v1466, %v1467
        %v1469 = vrot.slane %v1468, 1
        %v1470 = vadd.f32 %v1468, %v1469
        %v1471 = vrot.slane %v1344, 4
        %v1472 = vadd.f32 %v1344, %v1471
        %v1473 = vrot.slane %v1472, 2
        %v1474 = vadd.f32 %v1472, %v1473
        %v1475 = vrot.slane %v1474, 1
        %v1476 = vadd.f32 %v1474, %v1475
        %v1477 = vrot.slane %v1346, 4
        %v1478 = vadd.f32 %v1346, %v1477
        %v1479 = vrot.slane %v1478, 2
        %v1480 = vadd.f32 %v1478, %v1479
        %v1481 = vrot.slane %v1480, 1
        %v1482 = vadd.f32 %v1480, %v1481
        %v1483 = vrot.slane %v1348, 4
        %v1484 = vadd.f32 %v1348, %v1483
        %v1485 = vrot.slane %v1484, 2
        %v1486 = vadd.f32 %v1484, %v1485
        %v1487 = vrot.slane %v1486, 1
        %v1488 = vadd.f32 %v1486, %v1487
        %v1489 = vrot.slane %v1350, 4
        %v1490 = vadd.f32 %v1350, %v1489
        %v1491 = vrot.slane %v1490, 2
        %v1492 = vadd.f32 %v1490, %v1491
        %v1493 = vrot.slane %v1492, 1
        %v1494 = vadd.f32 %v1492, %v1493
        %v1495 = vrot.slane %v1352, 4
        %v1496 = vadd.f32 %v1352, %v1495
        %v1497 = vrot.slane %v1496, 2
        %v1498 = vadd.f32 %v1496, %v1497
        %v1499 = vrot.slane %v1498, 1
        %v1500 = vadd.f32 %v1498, %v1499
        %v1501 = vrot.slane %v1354, 4
        %v1502 = vadd.f32 %v1354, %v1501
        %v1503 = vrot.slane %v1502, 2
        %v1504 = vadd.f32 %v1502, %v1503
        %v1505 = vrot.slane %v1504, 1
        %v1506 = vadd.f32 %v1504, %v1505
        %v1507 = vrot.slane %v1356, 4
        %v1508 = vadd.f32 %v1356, %v1507
        %v1509 = vrot.slane %v1508, 2
        %v1510 = vadd.f32 %v1508, %v1509
        %v1511 = vrot.slane %v1510, 1
        %v1512 = vadd.f32 %v1510, %v1511
        %v1513 = vrot.slane %v1358, 4
        %v1514 = vadd.f32 %v1358, %v1513
        %v1515 = vrot.slane %v1514, 2
        %v1516 = vadd.f32 %v1514, %v1515
        %v1517 = vrot.slane %v1516, 1
        %v1518 = vadd.f32 %v1516, %v1517
        %v1519 = vrot.slane %v1360, 4
        %v1520 = vadd.f32 %v1360, %v1519
        %v1521 = vrot.slane %v1520, 2
        %v1522 = vadd.f32 %v1520, %v1521
        %v1523 = vrot.slane %v1522, 1
        %v1524 = vadd.f32 %v1522, %v1523
        %v1525 = vrot.slane %v1362, 4
        %v1526 = vadd.f32 %v1362, %v1525
        %v1527 = vrot.slane %v1526, 2
        %v1528 = vadd.f32 %v1526, %v1527
        %v1529 = vrot.slane %v1528, 1
        %v1530 = vadd.f32 %v1528, %v1529
        %v1531 = vrot.slane %v1364, 4
        %v1532 = vadd.f32 %v1364, %v1531
        %v1533 = vrot.slane %v1532, 2
        %v1534 = vadd.f32 %v1532, %v1533
        %v1535 = vrot.slane %v1534, 1
        %v1536 = vadd.f32 %v1534, %v1535
        %v1537 = vrot.slane %v1366, 4
        %v1538 = vadd.f32 %v1366, %v1537
        %v1539 = vrot.slane %v1538, 2
        %v1540 = vadd.f32 %v1538, %v1539
        %v1541 = vrot.slane %v1540, 1
        %v1542 = vadd.f32 %v1540, %v1541
        %v1543 = vrot.slane %v1368, 4
        %v1544 = vadd.f32 %v1368, %v1543
        %v1545 = vrot.slane %v1544, 2
        %v1546 = vadd.f32 %v1544, %v1545
        %v1547 = vrot.slane %v1546, 1
        %v1548 = vadd.f32 %v1546, %v1547
        %v1549 = vrot.slane %v1370, 4
        %v1550 = vadd.f32 %v1370, %v1549
        %v1551 = vrot.slane %v1550, 2
        %v1552 = vadd.f32 %v1550, %v1551
        %v1553 = vrot.slane %v1552, 1
        %v1554 = vadd.f32 %v1552, %v1553
        %v1555 = vrot.slane %v1372, 4
        %v1556 = vadd.f32 %v1372, %v1555
        %v1557 = vrot.slane %v1556, 2
        %v1558 = vadd.f32 %v1556, %v1557
        %v1559 = vrot.slane %v1558, 1
        %v1560 = vadd.f32 %v1558, %v1559
        %v1561 = vrot.slane %v1374, 4
        %v1562 = vadd.f32 %v1374, %v1561
        %v1563 = vrot.slane %v1562, 2
        %v1564 = vadd.f32 %v1562, %v1563
        %v1565 = vrot.slane %v1564, 1
        %v1566 = vadd.f32 %v1564, %v1565
        %v1567 = vrcp.pop %v1380
        %v1568 = vrcp.pop %v1386
        %v1569 = vrcp.pop %v1392
        %v1570 = vrcp.pop %v1398
        %v1571 = vrcp.pop %v1404
        %v1572 = vrcp.pop %v1410
        %v1573 = vrcp.pop %v1416
        %v1574 = vrcp.pop %v1422
        %v1575 = vrcp.pop %v1428
        %v1576 = vrcp.pop %v1434
        %v1577 = vrcp.pop %v1440
        %v1578 = vrcp.pop %v1446
        %v1579 = vrcp.pop %v1452
        %v1580 = vrcp.pop %v1458
        %v1581 = vrcp.pop %v1464
        %v1582 = vrcp.pop %v1470
        %v1583 = vrcp.pop %v1476
        %v1584 = vrcp.pop %v1482
        %v1585 = vrcp.pop %v1488
        %v1586 = vrcp.pop %v1494
        %v1587 = vrcp.pop %v1500
        %v1588 = vrcp.pop %v1506
        %v1589 = vrcp.pop %v1512
        %v1590 = vrcp.pop %v1518
        %v1591 = vrcp.pop %v1524
        %v1592 = vrcp.pop %v1530
        %v1593 = vrcp.pop %v1536
        %v1594 = vrcp.pop %v1542
        %v1595 = vrcp.pop %v1548
        %v1596 = vrcp.pop %v1554
        %v1597 = vrcp.pop %v1560
        %v1598 = vrcp.pop %v1566
        %v1599 = vmul.f32 %v1312, %v1567
        %v1600 = vmul.f32 %v1314, %v1568
        %v1601 = vmul.f32 %v1316, %v1569
        %v1602 = vmul.f32 %v1318, %v1570
        %v1603 = vmul.f32 %v1320, %v1571
        %v1604 = vmul.f32 %v1322, %v1572
        %v1605 = vmul.f32 %v1324, %v1573
        %v1606 = vmul.f32 %v1326, %v1574
        %v1607 = vmul.f32 %v1328, %v1575
        %v1608 = vmul.f32 %v1330, %v1576
        %v1609 = vmul.f32 %v1332, %v1577
        %v1610 = vmul.f32 %v1334, %v1578
        %v1611 = vmul.f32 %v1336, %v1579
        %v1612 = vmul.f32 %v1338, %v1580
        %v1613 = vmul.f32 %v1340, %v1581
        %v1614 = vmul.f32 %v1342, %v1582
        %v1615 = vmul.f32 %v1344, %v1583
        %v1616 = vmul.f32 %v1346, %v1584
        %v1617 = vmul.f32 %v1348, %v1585
        %v1618 = vmul.f32 %v1350, %v1586
        %v1619 = vmul.f32 %v1352, %v1587
        %v1620 = vmul.f32 %v1354, %v1588
        %v1621 = vmul.f32 %v1356, %v1589
        %v1622 = vmul.f32 %v1358, %v1590
        %v1623 = vmul.f32 %v1360, %v1591
        %v1624 = vmul.f32 %v1362, %v1592
        %v1625 = vmul.f32 %v1364, %v1593
        %v1626 = vmul.f32 %v1366, %v1594
        %v1627 = vmul.f32 %v1368, %v1595
        %v1628 = vmul.f32 %v1370, %v1596
        %v1629 = vmul.f32 %v1372, %v1597
        %v1630 = vmul.f32 %v1374, %v1598
        %v1631 = vpack.c.bf16 %v1599, %v1599
        %v1632 = vpack.c.bf16 %v1600, %v1600
        %v1633 = vpack.c.bf16 %v1601, %v1601
        %v1634 = vpack.c.bf16 %v1602, %v1602
        %v1635 = vpack.c.bf16 %v1603, %v1603
        %v1636 = vpack.c.bf16 %v1604, %v1604
        %v1637 = vpack.c.bf16 %v1605, %v1605
        %v1638 = vpack.c.bf16 %v1606, %v1606
        %v1639 = vpack.c.bf16 %v1607, %v1607
        %v1640 = vpack.c.bf16 %v1608, %v1608
        %v1641 = vpack.c.bf16 %v1609, %v1609
        %v1642 = vpack.c.bf16 %v1610, %v1610
        %v1643 = vpack.c.bf16 %v1611, %v1611
        %v1644 = vpack.c.bf16 %v1612, %v1612
        %v1645 = vpack.c.bf16 %v1613, %v1613
        %v1646 = vpack.c.bf16 %v1614, %v1614
        %v1647 = vpack.c.bf16 %v1615, %v1615
        %v1648 = vpack.c.bf16 %v1616, %v1616
        %v1649 = vpack.c.bf16 %v1617, %v1617
        %v1650 = vpack.c.bf16 %v1618, %v1618
        %v1651 = vpack.c.bf16 %v1619, %v1619
        %v1652 = vpack.c.bf16 %v1620, %v1620
        %v1653 = vpack.c.bf16 %v1621, %v1621
        %v1654 = vpack.c.bf16 %v1622, %v1622
        %v1655 = vpack.c.bf16 %v1623, %v1623
        %v1656 = vpack.c.bf16 %v1624, %v1624
        %v1657 = vpack.c.bf16 %v1625, %v1625
        %v1658 = vpack.c.bf16 %v1626, %v1626
        %v1659 = vpack.c.bf16 %v1627, %v1627
        %v1660 = vpack.c.bf16 %v1628, %v1628
        %v1661 = vpack.c.bf16 %v1629, %v1629
        %v1662 = vpack.c.bf16 %v1630, %v1630
        %v1663 = vmul.bf16 %v329, %v1631
        %v1664 = vmul.bf16 %v330, %v1632
        %v1665 = vmul.bf16 %v331, %v1633
        %v1666 = vmul.bf16 %v332, %v1634
        %v1667 = vmul.bf16 %v333, %v1635
        %v1668 = vmul.bf16 %v334, %v1636
        %v1669 = vmul.bf16 %v335, %v1637
        %v1670 = vmul.bf16 %v336, %v1638
        %v1671 = vmul.bf16 %v337, %v1639
        %v1672 = vmul.bf16 %v338, %v1640
        %v1673 = vmul.bf16 %v339, %v1641
        %v1674 = vmul.bf16 %v340, %v1642
        %v1675 = vmul.bf16 %v341, %v1643
        %v1676 = vmul.bf16 %v342, %v1644
        %v1677 = vmul.bf16 %v343, %v1645
        %v1678 = vmul.bf16 %v344, %v1646
        %v1679 = vmul.bf16 %v345, %v1647
        %v1680 = vmul.bf16 %v346, %v1648
        %v1681 = vmul.bf16 %v347, %v1649
        %v1682 = vmul.bf16 %v348, %v1650
        %v1683 = vmul.bf16 %v349, %v1651
        %v1684 = vmul.bf16 %v350, %v1652
        %v1685 = vmul.bf16 %v351, %v1653
        %v1686 = vmul.bf16 %v352, %v1654
        %v1687 = vmul.bf16 %v353, %v1655
        %v1688 = vmul.bf16 %v354, %v1656
        %v1689 = vmul.bf16 %v355, %v1657
        %v1690 = vmul.bf16 %v356, %v1658
        %v1691 = vmul.bf16 %v357, %v1659
        %v1692 = vmul.bf16 %v358, %v1660
        %v1693 = vmul.bf16 %v359, %v1661
        %v1694 = vmul.bf16 %v360, %v1662
        %v1695 = vunpack.c.l.bf16 %v1663
        %v1696 = vunpack.c.l.bf16 %v1664
        %v1697 = vunpack.c.l.bf16 %v1665
        %v1698 = vunpack.c.l.bf16 %v1666
        %v1699 = vunpack.c.l.bf16 %v1667
        %v1700 = vunpack.c.l.bf16 %v1668
        %v1701 = vunpack.c.l.bf16 %v1669
        %v1702 = vunpack.c.l.bf16 %v1670
        %v1703 = vunpack.c.l.bf16 %v1671
        %v1704 = vunpack.c.l.bf16 %v1672
        %v1705 = vunpack.c.l.bf16 %v1673
        %v1706 = vunpack.c.l.bf16 %v1674
        %v1707 = vunpack.c.l.bf16 %v1675
        %v1708 = vunpack.c.l.bf16 %v1676
        %v1709 = vunpack.c.l.bf16 %v1677
        %v1710 = vunpack.c.l.bf16 %v1678
        %v1711 = vunpack.c.l.bf16 %v1679
        %v1712 = vunpack.c.l.bf16 %v1680
        %v1713 = vunpack.c.l.bf16 %v1681
        %v1714 = vunpack.c.l.bf16 %v1682
        %v1715 = vunpack.c.l.bf16 %v1683
        %v1716 = vunpack.c.l.bf16 %v1684
        %v1717 = vunpack.c.l.bf16 %v1685
        %v1718 = vunpack.c.l.bf16 %v1686
        %v1719 = vunpack.c.l.bf16 %v1687
        %v1720 = vunpack.c.l.bf16 %v1688
        %v1721 = vunpack.c.l.bf16 %v1689
        %v1722 = vunpack.c.l.bf16 %v1690
        %v1723 = vunpack.c.l.bf16 %v1691
        %v1724 = vunpack.c.l.bf16 %v1692
        %v1725 = vunpack.c.l.bf16 %v1693
        %v1726 = vunpack.c.l.bf16 %v1694
        %v1727 = vsel %vm415, %v1695, 0.0
        %v1728 = vrot.slane %v1727, 4
        %v1729 = vadd.f32 %v1727, %v1728
        %v1730 = vrot.slane %v1729, 2
        %v1731 = vadd.f32 %v1729, %v1730
        %v1732 = vrot.slane %v1731, 1
        %v1733 = vadd.f32 %v1731, %v1732
        %v1734 = vsel %vm415, %v1696, 0.0
        %v1735 = vrot.slane %v1734, 4
        %v1736 = vadd.f32 %v1734, %v1735
        %v1737 = vrot.slane %v1736, 2
        %v1738 = vadd.f32 %v1736, %v1737
        %v1739 = vrot.slane %v1738, 1
        %v1740 = vadd.f32 %v1738, %v1739
        %v1741 = vsel %vm415, %v1697, 0.0
        %v1742 = vrot.slane %v1741, 4
        %v1743 = vadd.f32 %v1741, %v1742
        %v1744 = vrot.slane %v1743, 2
        %v1745 = vadd.f32 %v1743, %v1744
        %v1746 = vrot.slane %v1745, 1
        %v1747 = vadd.f32 %v1745, %v1746
        %v1748 = vsel %vm415, %v1698, 0.0
        %v1749 = vrot.slane %v1748, 4
        %v1750 = vadd.f32 %v1748, %v1749
        %v1751 = vrot.slane %v1750, 2
        %v1752 = vadd.f32 %v1750, %v1751
        %v1753 = vrot.slane %v1752, 1
        %v1754 = vadd.f32 %v1752, %v1753
        %v1755 = vsel %vm415, %v1699, 0.0
        %v1756 = vrot.slane %v1755, 4
        %v1757 = vadd.f32 %v1755, %v1756
        %v1758 = vrot.slane %v1757, 2
        %v1759 = vadd.f32 %v1757, %v1758
        %v1760 = vrot.slane %v1759, 1
        %v1761 = vadd.f32 %v1759, %v1760
        %v1762 = vsel %vm415, %v1700, 0.0
        %v1763 = vrot.slane %v1762, 4
        %v1764 = vadd.f32 %v1762, %v1763
        %v1765 = vrot.slane %v1764, 2
        %v1766 = vadd.f32 %v1764, %v1765
        %v1767 = vrot.slane %v1766, 1
        %v1768 = vadd.f32 %v1766, %v1767
        %v1769 = vsel %vm415, %v1701, 0.0
        %v1770 = vrot.slane %v1769, 4
        %v1771 = vadd.f32 %v1769, %v1770
        %v1772 = vrot.slane %v1771, 2
        %v1773 = vadd.f32 %v1771, %v1772
        %v1774 = vrot.slane %v1773, 1
        %v1775 = vadd.f32 %v1773, %v1774
        %v1776 = vsel %vm415, %v1702, 0.0
        %v1777 = vrot.slane %v1776, 4
        %v1778 = vadd.f32 %v1776, %v1777
        %v1779 = vrot.slane %v1778, 2
        %v1780 = vadd.f32 %v1778, %v1779
        %v1781 = vrot.slane %v1780, 1
        %v1782 = vadd.f32 %v1780, %v1781
        %v1783 = vsel %vm415, %v1703, 0.0
        %v1784 = vrot.slane %v1783, 4
        %v1785 = vadd.f32 %v1783, %v1784
        %v1786 = vrot.slane %v1785, 2
        %v1787 = vadd.f32 %v1785, %v1786
        %v1788 = vrot.slane %v1787, 1
        %v1789 = vadd.f32 %v1787, %v1788
        %v1790 = vsel %vm415, %v1704, 0.0
        %v1791 = vrot.slane %v1790, 4
        %v1792 = vadd.f32 %v1790, %v1791
        %v1793 = vrot.slane %v1792, 2
        %v1794 = vadd.f32 %v1792, %v1793
        %v1795 = vrot.slane %v1794, 1
        %v1796 = vadd.f32 %v1794, %v1795
        %v1797 = vsel %vm415, %v1705, 0.0
        %v1798 = vrot.slane %v1797, 4
        %v1799 = vadd.f32 %v1797, %v1798
        %v1800 = vrot.slane %v1799, 2
        %v1801 = vadd.f32 %v1799, %v1800
        %v1802 = vrot.slane %v1801, 1
        %v1803 = vadd.f32 %v1801, %v1802
        %v1804 = vsel %vm415, %v1706, 0.0
        %v1805 = vrot.slane %v1804, 4
        %v1806 = vadd.f32 %v1804, %v1805
        %v1807 = vrot.slane %v1806, 2
        %v1808 = vadd.f32 %v1806, %v1807
        %v1809 = vrot.slane %v1808, 1
        %v1810 = vadd.f32 %v1808, %v1809
        %v1811 = vsel %vm415, %v1707, 0.0
        %v1812 = vrot.slane %v1811, 4
        %v1813 = vadd.f32 %v1811, %v1812
        %v1814 = vrot.slane %v1813, 2
        %v1815 = vadd.f32 %v1813, %v1814
        %v1816 = vrot.slane %v1815, 1
        %v1817 = vadd.f32 %v1815, %v1816
        %v1818 = vsel %vm415, %v1708, 0.0
        %v1819 = vrot.slane %v1818, 4
        %v1820 = vadd.f32 %v1818, %v1819
        %v1821 = vrot.slane %v1820, 2
        %v1822 = vadd.f32 %v1820, %v1821
        %v1823 = vrot.slane %v1822, 1
        %v1824 = vadd.f32 %v1822, %v1823
        %v1825 = vsel %vm415, %v1709, 0.0
        %v1826 = vrot.slane %v1825, 4
        %v1827 = vadd.f32 %v1825, %v1826
        %v1828 = vrot.slane %v1827, 2
        %v1829 = vadd.f32 %v1827, %v1828
        %v1830 = vrot.slane %v1829, 1
        %v1831 = vadd.f32 %v1829, %v1830
        %v1832 = vsel %vm415, %v1710, 0.0
        %v1833 = vrot.slane %v1832, 4
        %v1834 = vadd.f32 %v1832, %v1833
        %v1835 = vrot.slane %v1834, 2
        %v1836 = vadd.f32 %v1834, %v1835
        %v1837 = vrot.slane %v1836, 1
        %v1838 = vadd.f32 %v1836, %v1837
        %v1839 = vsel %vm415, %v1711, 0.0
        %v1840 = vrot.slane %v1839, 4
        %v1841 = vadd.f32 %v1839, %v1840
        %v1842 = vrot.slane %v1841, 2
        %v1843 = vadd.f32 %v1841, %v1842
        %v1844 = vrot.slane %v1843, 1
        %v1845 = vadd.f32 %v1843, %v1844
        %v1846 = vsel %vm415, %v1712, 0.0
        %v1847 = vrot.slane %v1846, 4
        %v1848 = vadd.f32 %v1846, %v1847
        %v1849 = vrot.slane %v1848, 2
        %v1850 = vadd.f32 %v1848, %v1849
        %v1851 = vrot.slane %v1850, 1
        %v1852 = vadd.f32 %v1850, %v1851
        %v1853 = vsel %vm415, %v1713, 0.0
        %v1854 = vrot.slane %v1853, 4
        %v1855 = vadd.f32 %v1853, %v1854
        %v1856 = vrot.slane %v1855, 2
        %v1857 = vadd.f32 %v1855, %v1856
        %v1858 = vrot.slane %v1857, 1
        %v1859 = vadd.f32 %v1857, %v1858
        %v1860 = vsel %vm415, %v1714, 0.0
        %v1861 = vrot.slane %v1860, 4
        %v1862 = vadd.f32 %v1860, %v1861
        %v1863 = vrot.slane %v1862, 2
        %v1864 = vadd.f32 %v1862, %v1863
        %v1865 = vrot.slane %v1864, 1
        %v1866 = vadd.f32 %v1864, %v1865
        %v1867 = vsel %vm415, %v1715, 0.0
        %v1868 = vrot.slane %v1867, 4
        %v1869 = vadd.f32 %v1867, %v1868
        %v1870 = vrot.slane %v1869, 2
        %v1871 = vadd.f32 %v1869, %v1870
        %v1872 = vrot.slane %v1871, 1
        %v1873 = vadd.f32 %v1871, %v1872
        %v1874 = vsel %vm415, %v1716, 0.0
        %v1875 = vrot.slane %v1874, 4
        %v1876 = vadd.f32 %v1874, %v1875
        %v1877 = vrot.slane %v1876, 2
        %v1878 = vadd.f32 %v1876, %v1877
        %v1879 = vrot.slane %v1878, 1
        %v1880 = vadd.f32 %v1878, %v1879
        %v1881 = vsel %vm415, %v1717, 0.0
        %v1882 = vrot.slane %v1881, 4
        %v1883 = vadd.f32 %v1881, %v1882
        %v1884 = vrot.slane %v1883, 2
        %v1885 = vadd.f32 %v1883, %v1884
        %v1886 = vrot.slane %v1885, 1
        %v1887 = vadd.f32 %v1885, %v1886
        %v1888 = vsel %vm415, %v1718, 0.0
        %v1889 = vrot.slane %v1888, 4
        %v1890 = vadd.f32 %v1888, %v1889
        %v1891 = vrot.slane %v1890, 2
        %v1892 = vadd.f32 %v1890, %v1891
        %v1893 = vrot.slane %v1892, 1
        %v1894 = vadd.f32 %v1892, %v1893
        %v1895 = vsel %vm415, %v1719, 0.0
        %v1896 = vrot.slane %v1895, 4
        %v1897 = vadd.f32 %v1895, %v1896
        %v1898 = vrot.slane %v1897, 2
        %v1899 = vadd.f32 %v1897, %v1898
        %v1900 = vrot.slane %v1899, 1
        %v1901 = vadd.f32 %v1899, %v1900
        %v1902 = vsel %vm415, %v1720, 0.0
        %v1903 = vrot.slane %v1902, 4
        %v1904 = vadd.f32 %v1902, %v1903
        %v1905 = vrot.slane %v1904, 2
        %v1906 = vadd.f32 %v1904, %v1905
        %v1907 = vrot.slane %v1906, 1
        %v1908 = vadd.f32 %v1906, %v1907
        %v1909 = vsel %vm415, %v1721, 0.0
        %v1910 = vrot.slane %v1909, 4
        %v1911 = vadd.f32 %v1909, %v1910
        %v1912 = vrot.slane %v1911, 2
        %v1913 = vadd.f32 %v1911, %v1912
        %v1914 = vrot.slane %v1913, 1
        %v1915 = vadd.f32 %v1913, %v1914
        %v1916 = vsel %vm415, %v1722, 0.0
        %v1917 = vrot.slane %v1916, 4
        %v1918 = vadd.f32 %v1916, %v1917
        %v1919 = vrot.slane %v1918, 2
        %v1920 = vadd.f32 %v1918, %v1919
        %v1921 = vrot.slane %v1920, 1
        %v1922 = vadd.f32 %v1920, %v1921
        %v1923 = vsel %vm415, %v1723, 0.0
        %v1924 = vrot.slane %v1923, 4
        %v1925 = vadd.f32 %v1923, %v1924
        %v1926 = vrot.slane %v1925, 2
        %v1927 = vadd.f32 %v1925, %v1926
        %v1928 = vrot.slane %v1927, 1
        %v1929 = vadd.f32 %v1927, %v1928
        %v1930 = vsel %vm415, %v1724, 0.0
        %v1931 = vrot.slane %v1930, 4
        %v1932 = vadd.f32 %v1930, %v1931
        %v1933 = vrot.slane %v1932, 2
        %v1934 = vadd.f32 %v1932, %v1933
        %v1935 = vrot.slane %v1934, 1
        %v1936 = vadd.f32 %v1934, %v1935
        %v1937 = vsel %vm415, %v1725, 0.0
        %v1938 = vrot.slane %v1937, 4
        %v1939 = vadd.f32 %v1937, %v1938
        %v1940 = vrot.slane %v1939, 2
        %v1941 = vadd.f32 %v1939, %v1940
        %v1942 = vrot.slane %v1941, 1
        %v1943 = vadd.f32 %v1941, %v1942
        %v1944 = vsel %vm415, %v1726, 0.0
        %v1945 = vrot.slane %v1944, 4
        %v1946 = vadd.f32 %v1944, %v1945
        %v1947 = vrot.slane %v1946, 2
        %v1948 = vadd.f32 %v1946, %v1947
        %v1949 = vrot.slane %v1948, 1
        %v1950 = vadd.f32 %v1948, %v1949
        %v1951 = vmul.bf16 %v361, %v1631
        %v1952 = vmul.bf16 %v362, %v1632
        %v1953 = vmul.bf16 %v363, %v1633
        %v1954 = vmul.bf16 %v364, %v1634
        %v1955 = vmul.bf16 %v365, %v1635
        %v1956 = vmul.bf16 %v366, %v1636
        %v1957 = vmul.bf16 %v367, %v1637
        %v1958 = vmul.bf16 %v368, %v1638
        %v1959 = vmul.bf16 %v369, %v1639
        %v1960 = vmul.bf16 %v370, %v1640
        %v1961 = vmul.bf16 %v371, %v1641
        %v1962 = vmul.bf16 %v372, %v1642
        %v1963 = vmul.bf16 %v373, %v1643
        %v1964 = vmul.bf16 %v374, %v1644
        %v1965 = vmul.bf16 %v375, %v1645
        %v1966 = vmul.bf16 %v376, %v1646
        %v1967 = vmul.bf16 %v377, %v1647
        %v1968 = vmul.bf16 %v378, %v1648
        %v1969 = vmul.bf16 %v379, %v1649
        %v1970 = vmul.bf16 %v380, %v1650
        %v1971 = vmul.bf16 %v381, %v1651
        %v1972 = vmul.bf16 %v382, %v1652
        %v1973 = vmul.bf16 %v383, %v1653
        %v1974 = vmul.bf16 %v384, %v1654
        %v1975 = vmul.bf16 %v385, %v1655
        %v1976 = vmul.bf16 %v386, %v1656
        %v1977 = vmul.bf16 %v387, %v1657
        %v1978 = vmul.bf16 %v388, %v1658
        %v1979 = vmul.bf16 %v389, %v1659
        %v1980 = vmul.bf16 %v390, %v1660
        %v1981 = vmul.bf16 %v391, %v1661
        %v1982 = vmul.bf16 %v392, %v1662
        %v1983 = vunpack.c.l.bf16 %v1951
        %v1984 = vunpack.c.l.bf16 %v1952
        %v1985 = vunpack.c.l.bf16 %v1953
        %v1986 = vunpack.c.l.bf16 %v1954
        %v1987 = vunpack.c.l.bf16 %v1955
        %v1988 = vunpack.c.l.bf16 %v1956
        %v1989 = vunpack.c.l.bf16 %v1957
        %v1990 = vunpack.c.l.bf16 %v1958
        %v1991 = vunpack.c.l.bf16 %v1959
        %v1992 = vunpack.c.l.bf16 %v1960
        %v1993 = vunpack.c.l.bf16 %v1961
        %v1994 = vunpack.c.l.bf16 %v1962
        %v1995 = vunpack.c.l.bf16 %v1963
        %v1996 = vunpack.c.l.bf16 %v1964
        %v1997 = vunpack.c.l.bf16 %v1965
        %v1998 = vunpack.c.l.bf16 %v1966
        %v1999 = vunpack.c.l.bf16 %v1967
        %v2000 = vunpack.c.l.bf16 %v1968
        %v2001 = vunpack.c.l.bf16 %v1969
        %v2002 = vunpack.c.l.bf16 %v1970
        %v2003 = vunpack.c.l.bf16 %v1971
        %v2004 = vunpack.c.l.bf16 %v1972
        %v2005 = vunpack.c.l.bf16 %v1973
        %v2006 = vunpack.c.l.bf16 %v1974
        %v2007 = vunpack.c.l.bf16 %v1975
        %v2008 = vunpack.c.l.bf16 %v1976
        %v2009 = vunpack.c.l.bf16 %v1977
        %v2010 = vunpack.c.l.bf16 %v1978
        %v2011 = vunpack.c.l.bf16 %v1979
        %v2012 = vunpack.c.l.bf16 %v1980
        %v2013 = vunpack.c.l.bf16 %v1981
        %v2014 = vunpack.c.l.bf16 %v1982
        %v2015 = vsel %vm666, %v1983, 0.0
        %v2016 = vrot.slane %v2015, 4
        %v2017 = vadd.f32 %v2015, %v2016
        %v2018 = vrot.slane %v2017, 2
        %v2019 = vadd.f32 %v2017, %v2018
        %v2020 = vrot.slane %v2019, 1
        %v2021 = vadd.f32 %v2019, %v2020
        %v2022 = vsel %vm666, %v1984, 0.0
        %v2023 = vrot.slane %v2022, 4
        %v2024 = vadd.f32 %v2022, %v2023
        %v2025 = vrot.slane %v2024, 2
        %v2026 = vadd.f32 %v2024, %v2025
        %v2027 = vrot.slane %v2026, 1
        %v2028 = vadd.f32 %v2026, %v2027
        %v2029 = vsel %vm666, %v1985, 0.0
        %v2030 = vrot.slane %v2029, 4
        %v2031 = vadd.f32 %v2029, %v2030
        %v2032 = vrot.slane %v2031, 2
        %v2033 = vadd.f32 %v2031, %v2032
        %v2034 = vrot.slane %v2033, 1
        %v2035 = vadd.f32 %v2033, %v2034
        %v2036 = vsel %vm666, %v1986, 0.0
        %v2037 = vrot.slane %v2036, 4
        %v2038 = vadd.f32 %v2036, %v2037
        %v2039 = vrot.slane %v2038, 2
        %v2040 = vadd.f32 %v2038, %v2039
        %v2041 = vrot.slane %v2040, 1
        %v2042 = vadd.f32 %v2040, %v2041
        %v2043 = vsel %vm666, %v1987, 0.0
        %v2044 = vrot.slane %v2043, 4
        %v2045 = vadd.f32 %v2043, %v2044
        %v2046 = vrot.slane %v2045, 2
        %v2047 = vadd.f32 %v2045, %v2046
        %v2048 = vrot.slane %v2047, 1
        %v2049 = vadd.f32 %v2047, %v2048
        %v2050 = vsel %vm666, %v1988, 0.0
        %v2051 = vrot.slane %v2050, 4
        %v2052 = vadd.f32 %v2050, %v2051
        %v2053 = vrot.slane %v2052, 2
        %v2054 = vadd.f32 %v2052, %v2053
        %v2055 = vrot.slane %v2054, 1
        %v2056 = vadd.f32 %v2054, %v2055
        %v2057 = vsel %vm666, %v1989, 0.0
        %v2058 = vrot.slane %v2057, 4
        %v2059 = vadd.f32 %v2057, %v2058
        %v2060 = vrot.slane %v2059, 2
        %v2061 = vadd.f32 %v2059, %v2060
        %v2062 = vrot.slane %v2061, 1
        %v2063 = vadd.f32 %v2061, %v2062
        %v2064 = vsel %vm666, %v1990, 0.0
        %v2065 = vrot.slane %v2064, 4
        %v2066 = vadd.f32 %v2064, %v2065
        %v2067 = vrot.slane %v2066, 2
        %v2068 = vadd.f32 %v2066, %v2067
        %v2069 = vrot.slane %v2068, 1
        %v2070 = vadd.f32 %v2068, %v2069
        %v2071 = vsel %vm666, %v1991, 0.0
        %v2072 = vrot.slane %v2071, 4
        %v2073 = vadd.f32 %v2071, %v2072
        %v2074 = vrot.slane %v2073, 2
        %v2075 = vadd.f32 %v2073, %v2074
        %v2076 = vrot.slane %v2075, 1
        %v2077 = vadd.f32 %v2075, %v2076
        %v2078 = vsel %vm666, %v1992, 0.0
        %v2079 = vrot.slane %v2078, 4
        %v2080 = vadd.f32 %v2078, %v2079
        %v2081 = vrot.slane %v2080, 2
        %v2082 = vadd.f32 %v2080, %v2081
        %v2083 = vrot.slane %v2082, 1
        %v2084 = vadd.f32 %v2082, %v2083
        %v2085 = vsel %vm666, %v1993, 0.0
        %v2086 = vrot.slane %v2085, 4
        %v2087 = vadd.f32 %v2085, %v2086
        %v2088 = vrot.slane %v2087, 2
        %v2089 = vadd.f32 %v2087, %v2088
        %v2090 = vrot.slane %v2089, 1
        %v2091 = vadd.f32 %v2089, %v2090
        %v2092 = vsel %vm666, %v1994, 0.0
        %v2093 = vrot.slane %v2092, 4
        %v2094 = vadd.f32 %v2092, %v2093
        %v2095 = vrot.slane %v2094, 2
        %v2096 = vadd.f32 %v2094, %v2095
        %v2097 = vrot.slane %v2096, 1
        %v2098 = vadd.f32 %v2096, %v2097
        %v2099 = vsel %vm666, %v1995, 0.0
        %v2100 = vrot.slane %v2099, 4
        %v2101 = vadd.f32 %v2099, %v2100
        %v2102 = vrot.slane %v2101, 2
        %v2103 = vadd.f32 %v2101, %v2102
        %v2104 = vrot.slane %v2103, 1
        %v2105 = vadd.f32 %v2103, %v2104
        %v2106 = vsel %vm666, %v1996, 0.0
        %v2107 = vrot.slane %v2106, 4
        %v2108 = vadd.f32 %v2106, %v2107
        %v2109 = vrot.slane %v2108, 2
        %v2110 = vadd.f32 %v2108, %v2109
        %v2111 = vrot.slane %v2110, 1
        %v2112 = vadd.f32 %v2110, %v2111
        %v2113 = vsel %vm666, %v1997, 0.0
        %v2114 = vrot.slane %v2113, 4
        %v2115 = vadd.f32 %v2113, %v2114
        %v2116 = vrot.slane %v2115, 2
        %v2117 = vadd.f32 %v2115, %v2116
        %v2118 = vrot.slane %v2117, 1
        %v2119 = vadd.f32 %v2117, %v2118
        %v2120 = vsel %vm666, %v1998, 0.0
        %v2121 = vrot.slane %v2120, 4
        %v2122 = vadd.f32 %v2120, %v2121
        %v2123 = vrot.slane %v2122, 2
        %v2124 = vadd.f32 %v2122, %v2123
        %v2125 = vrot.slane %v2124, 1
        %v2126 = vadd.f32 %v2124, %v2125
        %v2127 = vsel %vm666, %v1999, 0.0
        %v2128 = vrot.slane %v2127, 4
        %v2129 = vadd.f32 %v2127, %v2128
        %v2130 = vrot.slane %v2129, 2
        %v2131 = vadd.f32 %v2129, %v2130
        %v2132 = vrot.slane %v2131, 1
        %v2133 = vadd.f32 %v2131, %v2132
        %v2134 = vsel %vm666, %v2000, 0.0
        %v2135 = vrot.slane %v2134, 4
        %v2136 = vadd.f32 %v2134, %v2135
        %v2137 = vrot.slane %v2136, 2
        %v2138 = vadd.f32 %v2136, %v2137
        %v2139 = vrot.slane %v2138, 1
        %v2140 = vadd.f32 %v2138, %v2139
        %v2141 = vsel %vm666, %v2001, 0.0
        %v2142 = vrot.slane %v2141, 4
        %v2143 = vadd.f32 %v2141, %v2142
        %v2144 = vrot.slane %v2143, 2
        %v2145 = vadd.f32 %v2143, %v2144
        %v2146 = vrot.slane %v2145, 1
        %v2147 = vadd.f32 %v2145, %v2146
        %v2148 = vsel %vm666, %v2002, 0.0
        %v2149 = vrot.slane %v2148, 4
        %v2150 = vadd.f32 %v2148, %v2149
        %v2151 = vrot.slane %v2150, 2
        %v2152 = vadd.f32 %v2150, %v2151
        %v2153 = vrot.slane %v2152, 1
        %v2154 = vadd.f32 %v2152, %v2153
        %v2155 = vsel %vm666, %v2003, 0.0
        %v2156 = vrot.slane %v2155, 4
        %v2157 = vadd.f32 %v2155, %v2156
        %v2158 = vrot.slane %v2157, 2
        %v2159 = vadd.f32 %v2157, %v2158
        %v2160 = vrot.slane %v2159, 1
        %v2161 = vadd.f32 %v2159, %v2160
        %v2162 = vsel %vm666, %v2004, 0.0
        %v2163 = vrot.slane %v2162, 4
        %v2164 = vadd.f32 %v2162, %v2163
        %v2165 = vrot.slane %v2164, 2
        %v2166 = vadd.f32 %v2164, %v2165
        %v2167 = vrot.slane %v2166, 1
        %v2168 = vadd.f32 %v2166, %v2167
        %v2169 = vsel %vm666, %v2005, 0.0
        %v2170 = vrot.slane %v2169, 4
        %v2171 = vadd.f32 %v2169, %v2170
        %v2172 = vrot.slane %v2171, 2
        %v2173 = vadd.f32 %v2171, %v2172
        %v2174 = vrot.slane %v2173, 1
        %v2175 = vadd.f32 %v2173, %v2174
        %v2176 = vsel %vm666, %v2006, 0.0
        %v2177 = vrot.slane %v2176, 4
        %v2178 = vadd.f32 %v2176, %v2177
        %v2179 = vrot.slane %v2178, 2
        %v2180 = vadd.f32 %v2178, %v2179
        %v2181 = vrot.slane %v2180, 1
        %v2182 = vadd.f32 %v2180, %v2181
        %v2183 = vsel %vm666, %v2007, 0.0
        %v2184 = vrot.slane %v2183, 4
        %v2185 = vadd.f32 %v2183, %v2184
        %v2186 = vrot.slane %v2185, 2
        %v2187 = vadd.f32 %v2185, %v2186
        %v2188 = vrot.slane %v2187, 1
        %v2189 = vadd.f32 %v2187, %v2188
        %v2190 = vsel %vm666, %v2008, 0.0
        %v2191 = vrot.slane %v2190, 4
        %v2192 = vadd.f32 %v2190, %v2191
        %v2193 = vrot.slane %v2192, 2
        %v2194 = vadd.f32 %v2192, %v2193
        %v2195 = vrot.slane %v2194, 1
        %v2196 = vadd.f32 %v2194, %v2195
        %v2197 = vsel %vm666, %v2009, 0.0
        %v2198 = vrot.slane %v2197, 4
        %v2199 = vadd.f32 %v2197, %v2198
        %v2200 = vrot.slane %v2199, 2
        %v2201 = vadd.f32 %v2199, %v2200
        %v2202 = vrot.slane %v2201, 1
        %v2203 = vadd.f32 %v2201, %v2202
        %v2204 = vsel %vm666, %v2010, 0.0
        %v2205 = vrot.slane %v2204, 4
        %v2206 = vadd.f32 %v2204, %v2205
        %v2207 = vrot.slane %v2206, 2
        %v2208 = vadd.f32 %v2206, %v2207
        %v2209 = vrot.slane %v2208, 1
        %v2210 = vadd.f32 %v2208, %v2209
        %v2211 = vsel %vm666, %v2011, 0.0
        %v2212 = vrot.slane %v2211, 4
        %v2213 = vadd.f32 %v2211, %v2212
        %v2214 = vrot.slane %v2213, 2
        %v2215 = vadd.f32 %v2213, %v2214
        %v2216 = vrot.slane %v2215, 1
        %v2217 = vadd.f32 %v2215, %v2216
        %v2218 = vsel %vm666, %v2012, 0.0
        %v2219 = vrot.slane %v2218, 4
        %v2220 = vadd.f32 %v2218, %v2219
        %v2221 = vrot.slane %v2220, 2
        %v2222 = vadd.f32 %v2220, %v2221
        %v2223 = vrot.slane %v2222, 1
        %v2224 = vadd.f32 %v2222, %v2223
        %v2225 = vsel %vm666, %v2013, 0.0
        %v2226 = vrot.slane %v2225, 4
        %v2227 = vadd.f32 %v2225, %v2226
        %v2228 = vrot.slane %v2227, 2
        %v2229 = vadd.f32 %v2227, %v2228
        %v2230 = vrot.slane %v2229, 1
        %v2231 = vadd.f32 %v2229, %v2230
        %v2232 = vsel %vm666, %v2014, 0.0
        %v2233 = vrot.slane %v2232, 4
        %v2234 = vadd.f32 %v2232, %v2233
        %v2235 = vrot.slane %v2234, 2
        %v2236 = vadd.f32 %v2234, %v2235
        %v2237 = vrot.slane %v2236, 1
        %v2238 = vadd.f32 %v2236, %v2237
        %v2239 = vpack.c.bf16 %v1733, %v1733
        %v2240 = vpack.c.bf16 %v1740, %v1740
        %v2241 = vpack.c.bf16 %v1747, %v1747
        %v2242 = vpack.c.bf16 %v1754, %v1754
        %v2243 = vpack.c.bf16 %v1761, %v1761
        %v2244 = vpack.c.bf16 %v1768, %v1768
        %v2245 = vpack.c.bf16 %v1775, %v1775
        %v2246 = vpack.c.bf16 %v1782, %v1782
        %v2247 = vpack.c.bf16 %v1789, %v1789
        %v2248 = vpack.c.bf16 %v1796, %v1796
        %v2249 = vpack.c.bf16 %v1803, %v1803
        %v2250 = vpack.c.bf16 %v1810, %v1810
        %v2251 = vpack.c.bf16 %v1817, %v1817
        %v2252 = vpack.c.bf16 %v1824, %v1824
        %v2253 = vpack.c.bf16 %v1831, %v1831
        %v2254 = vpack.c.bf16 %v1838, %v1838
        %v2255 = vpack.c.bf16 %v1845, %v1845
        %v2256 = vpack.c.bf16 %v1852, %v1852
        %v2257 = vpack.c.bf16 %v1859, %v1859
        %v2258 = vpack.c.bf16 %v1866, %v1866
        %v2259 = vpack.c.bf16 %v1873, %v1873
        %v2260 = vpack.c.bf16 %v1880, %v1880
        %v2261 = vpack.c.bf16 %v1887, %v1887
        %v2262 = vpack.c.bf16 %v1894, %v1894
        %v2263 = vpack.c.bf16 %v1901, %v1901
        %v2264 = vpack.c.bf16 %v1908, %v1908
        %v2265 = vpack.c.bf16 %v1915, %v1915
        %v2266 = vpack.c.bf16 %v1922, %v1922
        %v2267 = vpack.c.bf16 %v1929, %v1929
        %v2268 = vpack.c.bf16 %v1936, %v1936
        %v2269 = vpack.c.bf16 %v1943, %v1943
        %v2270 = vpack.c.bf16 %v1950, %v1950
        %v2271 = vpack.c.bf16 %v2021, %v2021
        %v2272 = vpack.c.bf16 %v2028, %v2028
        %v2273 = vpack.c.bf16 %v2035, %v2035
        %v2274 = vpack.c.bf16 %v2042, %v2042
        %v2275 = vpack.c.bf16 %v2049, %v2049
        %v2276 = vpack.c.bf16 %v2056, %v2056
        %v2277 = vpack.c.bf16 %v2063, %v2063
        %v2278 = vpack.c.bf16 %v2070, %v2070
        %v2279 = vpack.c.bf16 %v2077, %v2077
        %v2280 = vpack.c.bf16 %v2084, %v2084
        %v2281 = vpack.c.bf16 %v2091, %v2091
        %v2282 = vpack.c.bf16 %v2098, %v2098
        %v2283 = vpack.c.bf16 %v2105, %v2105
        %v2284 = vpack.c.bf16 %v2112, %v2112
        %v2285 = vpack.c.bf16 %v2119, %v2119
        %v2286 = vpack.c.bf16 %v2126, %v2126
        %v2287 = vpack.c.bf16 %v2133, %v2133
        %v2288 = vpack.c.bf16 %v2140, %v2140
        %v2289 = vpack.c.bf16 %v2147, %v2147
        %v2290 = vpack.c.bf16 %v2154, %v2154
        %v2291 = vpack.c.bf16 %v2161, %v2161
        %v2292 = vpack.c.bf16 %v2168, %v2168
        %v2293 = vpack.c.bf16 %v2175, %v2175
        %v2294 = vpack.c.bf16 %v2182, %v2182
        %v2295 = vpack.c.bf16 %v2189, %v2189
        %v2296 = vpack.c.bf16 %v2196, %v2196
        %v2297 = vpack.c.bf16 %v2203, %v2203
        %v2298 = vpack.c.bf16 %v2210, %v2210
        %v2299 = vpack.c.bf16 %v2217, %v2217
        %v2300 = vpack.c.bf16 %v2224, %v2224
        %v2301 = vpack.c.bf16 %v2231, %v2231
        %v2302 = vpack.c.bf16 %v2238, %v2238
        %v2307 = vunpack.c.l.b16 %v325
        %v2308 = vunpack.c.l.b16 %v326
        %v2309 = vunpack.c.l.b16 %v327
        %v2310 = vunpack.c.l.b16 %v328
        %v2311 = vpack.c.b16 %v2308, %v2307
        %v2312 = vpack.c.b16 %v2310, %v2309
        %v2345 = vunpack.c.l.b16 %v2239
        %v2346 = vunpack.c.l.b16 %v2240
        %v2347 = vunpack.c.l.b16 %v2241
        %v2348 = vunpack.c.l.b16 %v2242
        %v2349 = vunpack.c.l.b16 %v2243
        %v2350 = vunpack.c.l.b16 %v2244
        %v2351 = vunpack.c.l.b16 %v2245
        %v2352 = vunpack.c.l.b16 %v2246
        %v2353 = vunpack.c.l.b16 %v2247
        %v2354 = vunpack.c.l.b16 %v2248
        %v2355 = vunpack.c.l.b16 %v2249
        %v2356 = vunpack.c.l.b16 %v2250
        %v2357 = vunpack.c.l.b16 %v2251
        %v2358 = vunpack.c.l.b16 %v2252
        %v2359 = vunpack.c.l.b16 %v2253
        %v2360 = vunpack.c.l.b16 %v2254
        %v2361 = vunpack.c.l.b16 %v2255
        %v2362 = vunpack.c.l.b16 %v2256
        %v2363 = vunpack.c.l.b16 %v2257
        %v2364 = vunpack.c.l.b16 %v2258
        %v2365 = vunpack.c.l.b16 %v2259
        %v2366 = vunpack.c.l.b16 %v2260
        %v2367 = vunpack.c.l.b16 %v2261
        %v2368 = vunpack.c.l.b16 %v2262
        %v2369 = vunpack.c.l.b16 %v2263
        %v2370 = vunpack.c.l.b16 %v2264
        %v2371 = vunpack.c.l.b16 %v2265
        %v2372 = vunpack.c.l.b16 %v2266
        %v2373 = vunpack.c.l.b16 %v2267
        %v2374 = vunpack.c.l.b16 %v2268
        %v2375 = vunpack.c.l.b16 %v2269
        %v2376 = vunpack.c.l.b16 %v2270
        %vm2377 = vcmask 1041409
        %v2378 = vsel %vm2377, %v2346, %v2345
        %vm2379 = vcmask 1042434
        %v2380 = vsel %vm2379, %v2347, %v2378
        %vm2381 = vcmask 1043459
        %v2382 = vsel %vm2381, %v2348, %v2380
        %vm2383 = vcmask 1044484
        %v2384 = vsel %vm2383, %v2349, %v2382
        %vm2385 = vcmask 1045509
        %v2386 = vsel %vm2385, %v2350, %v2384
        %vm2387 = vcmask 1046534
        %v2388 = vsel %vm2387, %v2351, %v2386
        %vm2389 = vcmask 1047559
        %v2390 = vsel %vm2389, %v2352, %v2388
        %v2391 = vsel %vm2377, %v2354, %v2353
        %v2392 = vsel %vm2379, %v2355, %v2391
        %v2393 = vsel %vm2381, %v2356, %v2392
        %v2394 = vsel %vm2383, %v2357, %v2393
        %v2395 = vsel %vm2385, %v2358, %v2394
        %v2396 = vsel %vm2387, %v2359, %v2395
        %v2397 = vsel %vm2389, %v2360, %v2396
        %v2398 = vsel %vm2377, %v2362, %v2361
        %v2399 = vsel %vm2379, %v2363, %v2398
        %v2400 = vsel %vm2381, %v2364, %v2399
        %v2401 = vsel %vm2383, %v2365, %v2400
        %v2402 = vsel %vm2385, %v2366, %v2401
        %v2403 = vsel %vm2387, %v2367, %v2402
        %v2404 = vsel %vm2389, %v2368, %v2403
        %v2405 = vsel %vm2377, %v2370, %v2369
        %v2406 = vsel %vm2379, %v2371, %v2405
        %v2407 = vsel %vm2381, %v2372, %v2406
        %v2408 = vsel %vm2383, %v2373, %v2407
        %v2409 = vsel %vm2385, %v2374, %v2408
        %v2410 = vsel %vm2387, %v2375, %v2409
        %v2411 = vsel %vm2389, %v2376, %v2410
        %v2412 = vpack.c.b16 %v2397, %v2390
        %v2413 = vpack.c.b16 %v2411, %v2404
        %2414 = vrot.lane.b32.xlu0 %v2412, 64
        %v2415 = vpop.permute.xlu0 %2414
        %2416 = vrot.lane.b32.xlu0 %v2413, 64
        %v2417 = vpop.permute.xlu0 %2416
        %v2450 = vunpack.c.l.b16 %v2271
        %v2451 = vunpack.c.l.b16 %v2272
        %v2452 = vunpack.c.l.b16 %v2273
        %v2453 = vunpack.c.l.b16 %v2274
        %v2454 = vunpack.c.l.b16 %v2275
        %v2455 = vunpack.c.l.b16 %v2276
        %v2456 = vunpack.c.l.b16 %v2277
        %v2457 = vunpack.c.l.b16 %v2278
        %v2458 = vunpack.c.l.b16 %v2279
        %v2459 = vunpack.c.l.b16 %v2280
        %v2460 = vunpack.c.l.b16 %v2281
        %v2461 = vunpack.c.l.b16 %v2282
        %v2462 = vunpack.c.l.b16 %v2283
        %v2463 = vunpack.c.l.b16 %v2284
        %v2464 = vunpack.c.l.b16 %v2285
        %v2465 = vunpack.c.l.b16 %v2286
        %v2466 = vunpack.c.l.b16 %v2287
        %v2467 = vunpack.c.l.b16 %v2288
        %v2468 = vunpack.c.l.b16 %v2289
        %v2469 = vunpack.c.l.b16 %v2290
        %v2470 = vunpack.c.l.b16 %v2291
        %v2471 = vunpack.c.l.b16 %v2292
        %v2472 = vunpack.c.l.b16 %v2293
        %v2473 = vunpack.c.l.b16 %v2294
        %v2474 = vunpack.c.l.b16 %v2295
        %v2475 = vunpack.c.l.b16 %v2296
        %v2476 = vunpack.c.l.b16 %v2297
        %v2477 = vunpack.c.l.b16 %v2298
        %v2478 = vunpack.c.l.b16 %v2299
        %v2479 = vunpack.c.l.b16 %v2300
        %v2480 = vunpack.c.l.b16 %v2301
        %v2481 = vunpack.c.l.b16 %v2302
        %v2482 = vsel %vm2377, %v2451, %v2450
        %v2483 = vsel %vm2379, %v2452, %v2482
        %v2484 = vsel %vm2381, %v2453, %v2483
        %v2485 = vsel %vm2383, %v2454, %v2484
        %v2486 = vsel %vm2385, %v2455, %v2485
        %v2487 = vsel %vm2387, %v2456, %v2486
        %v2488 = vsel %vm2389, %v2457, %v2487
        %v2489 = vsel %vm2377, %v2459, %v2458
        %v2490 = vsel %vm2379, %v2460, %v2489
        %v2491 = vsel %vm2381, %v2461, %v2490
        %v2492 = vsel %vm2383, %v2462, %v2491
        %v2493 = vsel %vm2385, %v2463, %v2492
        %v2494 = vsel %vm2387, %v2464, %v2493
        %v2495 = vsel %vm2389, %v2465, %v2494
        %v2496 = vsel %vm2377, %v2467, %v2466
        %v2497 = vsel %vm2379, %v2468, %v2496
        %v2498 = vsel %vm2381, %v2469, %v2497
        %v2499 = vsel %vm2383, %v2470, %v2498
        %v2500 = vsel %vm2385, %v2471, %v2499
        %v2501 = vsel %vm2387, %v2472, %v2500
        %v2502 = vsel %vm2389, %v2473, %v2501
        %v2503 = vsel %vm2377, %v2475, %v2474
        %v2504 = vsel %vm2379, %v2476, %v2503
        %v2505 = vsel %vm2381, %v2477, %v2504
        %v2506 = vsel %vm2383, %v2478, %v2505
        %v2507 = vsel %vm2385, %v2479, %v2506
        %v2508 = vsel %vm2387, %v2480, %v2507
        %v2509 = vsel %vm2389, %v2481, %v2508
        %v2510 = vpack.c.b16 %v2495, %v2488
        %v2511 = vpack.c.b16 %v2509, %v2502
        %v2514 = vsel %vm415, %v2311, %v2415
        %v2518 = vsel %vm415, %v2312, %v2417
        %v2520 = vld [vmem:[%s6] sm:$0xf]
        %v2521 = vld [vmem:[%s6 + $0x4] sm:$0xf]
        %v2522 = vld [vmem:[%s6 + $0x8] sm:$0xf]
        %v2523 = vld [vmem:[%s6 + $0xc] sm:$0xf]
        %v2524 = vld [vmem:[%s6 + $0x10] sm:$0xf]
        %v2525 = vld [vmem:[%s6 + $0x14] sm:$0xf]
        %v2526 = vld [vmem:[%s6 + $0x18] sm:$0xf]
        %v2527 = vld [vmem:[%s6 + $0x1c] sm:$0xf]
        %v2528 = vld [vmem:[%s6 + $0x20] sm:$0xf]
        %v2529 = vld [vmem:[%s6 + $0x24] sm:$0xf]
        %v2530 = vld [vmem:[%s6 + $0x28] sm:$0xf]
        %v2531 = vld [vmem:[%s6 + $0x2c] sm:$0xf]
        %v2532 = vld [vmem:[%s6 + $0x30] sm:$0xf]
        %v2533 = vld [vmem:[%s6 + $0x34] sm:$0xf]
        %v2534 = vld [vmem:[%s6 + $0x38] sm:$0xf]
        %v2535 = vld [vmem:[%s6 + $0x3c] sm:$0xf]
        %v2536 = vld [vmem:[%s6 + $0x40] sm:$0xf]
        %v2537 = vld [vmem:[%s6 + $0x44] sm:$0xf]
        %v2538 = vld [vmem:[%s6 + $0x48] sm:$0xf]
        %v2539 = vld [vmem:[%s6 + $0x4c] sm:$0xf]
        %v2560 = vunpack.c.l.b16 %v2520
        %v2561 = vunpack.c.l.b16 %v2521
        %v2562 = vunpack.c.l.b16 %v2522
        %v2563 = vunpack.c.l.b16 %v2523
        %v2564 = vunpack.c.l.b16 %v2524
        %v2565 = vunpack.c.l.b16 %v2525
        %v2566 = vunpack.c.l.b16 %v2526
        %v2567 = vunpack.c.l.b16 %v2527
        %v2568 = vunpack.c.l.b16 %v2528
        %v2569 = vunpack.c.l.b16 %v2529
        %v2570 = vunpack.c.l.b16 %v2530
        %v2571 = vunpack.c.l.b16 %v2531
        %v2572 = vunpack.c.l.b16 %v2532
        %v2573 = vunpack.c.l.b16 %v2533
        %v2574 = vunpack.c.l.b16 %v2534
        %v2575 = vunpack.c.l.b16 %v2535
        %v2576 = vunpack.c.l.b16 %v2536
        %v2577 = vunpack.c.l.b16 %v2537
        %v2578 = vunpack.c.l.b16 %v2538
        %v2579 = vunpack.c.l.b16 %v2539
        %v2580 = vpack.c.b16 %v2561, %v2560
        %v2581 = vpack.c.b16 %v2563, %v2562
        %v2582 = vpack.c.b16 %v2565, %v2564
        %v2583 = vpack.c.b16 %v2567, %v2566
        %v2584 = vpack.c.b16 %v2569, %v2568
        %v2585 = vpack.c.b16 %v2571, %v2570
        %v2586 = vpack.c.b16 %v2573, %v2572
        %v2587 = vpack.c.b16 %v2575, %v2574
        %v2588 = vpack.c.b16 %v2577, %v2576
        %v2589 = vpack.c.b16 %v2579, %v2578
        %v2601 = vsel %vm666, %v2510, 0
        %v2604 = vsel %vm666, %v2511, 0
        %2606 = vmatprep.subr.bf16.mxu0 0
        %2607 = vmatpush1.bf16.msra.mxu0 %v2587
        %2608 = vmatprep.subr.bf16.mxu0 0
        %2609 = vmatpush1.bf16.msra.mxu0 %v2586
        %2610 = vmatprep.subr.bf16.mxu0 0
        %2611 = vmatpush1.bf16.msra.mxu0 %v2585
        %2612 = vmatprep.subr.bf16.mxu0 0
        %2613 = vmatpush1.bf16.msra.mxu0 %v2584
        %2614 = vmatprep.subr.bf16.mxu0 0
        %2615 = vmatpush1.bf16.msra.mxu0 %v2583
        %2616 = vmatprep.subr.bf16.mxu0 0
        %2617 = vmatpush1.bf16.msra.mxu0 %v2582
        %2618 = vmatprep.subr.bf16.mxu0 0
        %2619 = vmatpush1.bf16.msra.mxu0 %v2581
        %2620 = vmatprep.subr.bf16.mxu0 0
        %2621 = vmatpush1.bf16.msra.mxu0 %v2580
        %2622 = vmatprep.subr.bf16.mxu0 0
        %2623 = vmatpush2.bf16.msra.mxu0 0
        %2624 = vmatprep.subr.bf16.mxu0 0
        %2625 = vmatpush2.bf16.msra.mxu0 0
        %2626 = vmatprep.subr.bf16.mxu0 0
        %2627 = vmatpush2.bf16.msra.mxu0 0
        %2628 = vmatprep.subr.bf16.mxu0 0
        %2629 = vmatpush2.bf16.msra.mxu0 0
        %2630 = vmatprep.subr.bf16.mxu0 0
        %2631 = vmatpush2.bf16.msra.mxu0 0
        %2632 = vmatprep.subr.bf16.mxu0 0
        %2633 = vmatpush2.bf16.msra.mxu0 0
        %2634 = vmatprep.subr.bf16.mxu0 0
        %2635 = vmatpush2.bf16.msra.mxu0 %v2589
        %2636 = vmatprep.subr.bf16.mxu0 0
        %2637 = vmatpush2.bf16.msra.mxu0 %v2588
        %2638 = vmatprep.mubr.bf16.mxu0 %v2601
        %2639 = vmatmul.mubr.bf16.gmra.mxu0 %v2514
        %v2640 = vpop.f32.mrf.mxu0
        %v2641 = vadd.f32 0.0, %v2640
        %v2642 = vpop.f32.mrf.mxu0
        %v2643 = vpop.f32.mrf.mxu0
        %v2644 = vadd.f32 0.0, %v2643
        %v2645 = vpop.f32.mrf.mxu0
        %2646 = vmatprep.mubr.bf16.mxu0 %v2604
        %2647 = vmatmul.mubr.bf16.gmra.mxu0 %v2518
        %v2648 = vpop.f32.mrf.mxu0
        %v2649 = vadd.f32 0.0, %v2648
        %v2650 = vpop.f32.mrf.mxu0
        %v2651 = vpop.f32.mrf.mxu0
        %v2652 = vadd.f32 0.0, %v2651
        %v2653 = vpop.f32.mrf.mxu0
        %2654 = vdwg.mxu0
        %v2655 = vmax.f32 %v2641, 0.0
        %v2656 = vmax.f32 %v2644, 0.0
        %v2657 = vmax.f32 %v2649, 0.0
        %v2658 = vmax.f32 %v2652, 0.0
        %v2659 = vpack.c.bf16 %v2656, %v2655
        %v2660 = vpack.c.bf16 %v2658, %v2657
        %v2663 = vunpack.c.l.b16 %v2659
        %v2664 = vunpack.c.h.b16 %v2659
        %v2665 = vunpack.c.l.b16 %v2660
        %v2666 = vunpack.c.h.b16 %v2660
        %v2667 = vpack.c.b16 %v2663, %v2663
        %v2668 = vpack.c.b16 %v2664, %v2664
        %v2669 = vpack.c.b16 %v2665, %v2665
        %v2670 = vpack.c.b16 %v2666, %v2666
        %2675 = vst [vmem:[%s304] sm:$0xf] %v2667
        %2676 = vst [vmem:[%s304 + $0x4] sm:$0xf] %v2668
        %2677 = vst [vmem:[%s304 + $0x8] sm:$0xf] %v2669
        %2678 = vst [vmem:[%s304 + $0xc] sm:$0xf] %v2670
        %s2679 = sand.u32 %s191, 1
        %s2680 = scalar_lea.sflag [#allocation3], %s2679
        %s2681 = sand.u32 %s191, 1
        %s2682 = smul.addr %s2681, 16
        %s2683 = scalar_lea.vmem [#allocation2], %s2682
        // Predicated region
        $region49: #{tpu_custom_call.1} parent=47 // pred_check
          %p2684 = pneg %p201
        $region50: #{tpu_custom_call.1} parent=47 // pred_check_branch
          %2686 = sbr.rel (%p2684) target = $region52
        $region51: #{tpu_custom_call.1} parent=47 // pred_region
          %s2687 = smul.u32 4, %s21
          %s2689 = ssub.s32 256, 256
          %2690 = vsyncadd %s2680, %s2689
          %s2691 = smul.addr %s2687, 64
          %s2692 = scalar_lea.hbm %s7, %s2691
          %s2693 = sshll.u32 %s2683, 4
          %s2694 = int_to_ptr.vmem [resolvable:$true] %s2693
          %2699 = dma.vmem_to_hbm [thread:$0]  %s2694, 256, %s2692, %s2680, 64, 64, 4
        $region52: #{tpu_custom_call.1} parent=47 // pred_fallthru
          _
      $region48: #{tpu_custom_call.1} parent=5 // pred_fallthru
        _
      %p2700 = scmp.le.s32.totalorder 2, %s16
      // Predicated region
      $region53: #{tpu_custom_call.1} parent=5 // pred_check
        %p2701 = pneg %p2700
      $region54: #{tpu_custom_call.1} parent=5 // pred_check_branch
        %2703 = sbr.rel (%p2701) target = $region56
      $region55: #{tpu_custom_call.1} parent=5 // pred_region
        %s2704 = ssub.s32 %s16, 2
        // Predicated region
        $region57: #{tpu_custom_call.1} parent=55 // pred_check
          %p2705 = pneg %p207
        $region58: #{tpu_custom_call.1} parent=55 // pred_check_branch
          %2707 = sbr.rel (%p2705) target = $region60
        $region59: #{tpu_custom_call.1} parent=55 // pred_region
          %s2708 = sand.u32 %s192, 1
          %s2709 = scalar_lea.sflag [#allocation3], %s2708
          %s2710 = sand.u32 %s192, 1
          %s2711 = smul.addr %s2710, 16
          %s2712 = scalar_lea.vmem [#allocation2], %s2711
          %2713 = dma.done %s2709, 256
        $region60: #{tpu_custom_call.1} parent=55 // pred_fallthru
          _
      $region56: #{tpu_custom_call.1} parent=5 // pred_fallthru
        _
    $region6: #{tpu_custom_call.1} parent=1 // loop_footer
      %s20 = sadd.s32 1, %s16
    $region7: #{tpu_custom_call.1} parent=1 // loop_footer_branch
      %15 = sbr.rel target = $region3
    $region8: #{tpu_custom_call.1} parent=1 // loop_exit
      _
    %2714 = vsyncpa [#allocation3], 1
    %s2715 = scalar_lea.sflag [#allocation3], 1
    %2716 = vsyncpa %s2715, 1

</llo_original>
